<compile_context>
chip_gen: v7x
topology: tpu7x:2x2x1
jax: 0.10.0
libtpu: 0.0.40
codegen_flags: <defaults>
</compile_context>

<pallas_src>
import functools

import jax
import jax.numpy as jnp
from jax.experimental import pallas as pl
from jax.experimental.pallas import tpu as pltpu


_LPAD = 8  # left halo pad along W (the sublane axis), kept 8-aligned so the
           # interior store into the halo scratch is fully tile-aligned.


def _fill_halo(pad_ref, x_ref, H, W):
    """Zero the (tiny) halo scratch and drop the image into its interior.

    pad_ref: (H+2, W+2*_LPAD, C) f32 VMEM scratch.
    x_ref:   (1, H, W, C) input tile.  Cast to f32 happens exactly once here.
    """
    pad_ref[...] = jnp.zeros_like(pad_ref)
    pad_ref[pl.ds(1, H), pl.ds(_LPAD, W), :] = x_ref[0].astype(jnp.float32)


def _depthwise_3x3(pad_ref, wdw, H, W):
    """9 shifted multiply-accumulates on the VPU.

    pad_ref: zero-filled halo scratch, image at rows [1, H], cols
             [_LPAD, _LPAD+W).   wdw: (3, 3, C) f32.   Returns (H, W, C) f32.
    """
    C = wdw.shape[-1]
    acc = jnp.zeros((H, W, C), jnp.float32)
    for kh in range(3):                       # H shift: outer dim -> free
        for kw in range(3):                   # W shift: sublane-offset load
            tap = pad_ref[pl.ds(kh, H), pl.ds(_LPAD - 1 + kw, W), :]
            acc = acc + tap * wdw[kh:kh + 1, kw:kw + 1, :]
    return acc


def dw_kernel(x_ref, wdw_ref, o_ref, pad_ref, *, H, W):
    # depthwise only (pointwise=False path)
    _fill_halo(pad_ref, x_ref, H, W)
    wdw = wdw_ref[...].astype(jnp.float32)
    acc = _depthwise_3x3(pad_ref, wdw, H, W)            # (H, W, C)
    o_ref[0] = acc.reshape(H * W, acc.shape[-1]).astype(o_ref.dtype)


def dws_kernel(x_ref, wdw_ref, wpw_ref, o_ref, pad_ref, *, H, W):
    # depthwise 3x3 (VPU) + pointwise 1x1 (MXU)
    _fill_halo(pad_ref, x_ref, H, W)
    wdw = wdw_ref[...].astype(jnp.float32)
    acc = _depthwise_3x3(pad_ref, wdw, H, W)            # (H, W, C)
    C = acc.shape[-1]
    # NOTE(v6e/v7x): once C/O are MXU-scale, cast both dot operands to bf16
    # (keep preferred_element_type=f32) for full-rate MXU; at C=4 it's noise.
    wpw = wpw_ref[...].astype(jnp.float32)              # (C, O)
    out = jnp.dot(acc.reshape(H * W, C), wpw,
                  preferred_element_type=jnp.float32)   # (H*W, O) on the MXU
    o_ref[0] = out.astype(o_ref.dtype)


def dws_conv(x, w_dw, w_pw=None):
    """x: (N, C, H, W) NCHW; w_dw: (C, 3, 3); w_pw: (O, C) or None.

    Matches torch.nn.Conv2d semantics for the module defaults:
    3x3 depthwise (stride=1, padding=1, groups=C, no bias) followed by an
    optional 1x1 pointwise conv (no bias).  Returns NCHW.
    """
    N, C, H, W = x.shape

    # Wrapper-side layout plumbing: channels-last so C rides the lane axis.
    x_nhwc = jnp.transpose(x, (0, 2, 3, 1))             # (N, H, W, C)
    w_dw_cl = jnp.transpose(w_dw, (1, 2, 0))            # (3, 3, C)

    x_spec = pl.BlockSpec((1, H, W, C), lambda n: (n, 0, 0, 0))
    wdw_spec = pl.BlockSpec((3, 3, C), lambda n: (0, 0, 0))
    scratch = [pltpu.VMEM((H + 2, W + 2 * _LPAD, C), jnp.float32)]
    cparams = pltpu.CompilerParams(dimension_semantics=("parallel",))

    # TODO(synk): for large H*W / C, add grid axes over H-row tiles (halo via
    # manual DMA) and output-channel tiles for pipeline depth and v7x's
    # smaller VMEM; toy shapes here fit comfortably in one block per image.

    if w_pw is None:
        out_flat = pl.pallas_call(
            functools.partial(dw_kernel, H=H, W=W),
            out_shape=jax.ShapeDtypeStruct((N, H * W, C), x.dtype),
            grid=(N,),
            in_specs=[x_spec, wdw_spec],
            out_specs=pl.BlockSpec((1, H * W, C), lambda n: (n, 0, 0)),
            scratch_shapes=scratch,
            compiler_params=cparams,
        )(x_nhwc, w_dw_cl)
        Co = C
    else:
        Co = w_pw.shape[0]
        w_pw_t = jnp.transpose(w_pw, (1, 0))            # (C, O)
        out_flat = pl.pallas_call(
            functools.partial(dws_kernel, H=H, W=W),
            out_shape=jax.ShapeDtypeStruct((N, H * W, Co), x.dtype),
            grid=(N,),
            in_specs=[x_spec, wdw_spec,
                      pl.BlockSpec((C, Co), lambda n: (0, 0))],
            out_specs=pl.BlockSpec((1, H * W, Co), lambda n: (n, 0, 0)),
            scratch_shapes=scratch,
            compiler_params=cparams,
        )(x_nhwc, w_dw_cl, w_pw_t)

    # Back to the module's NCHW contract.
    return jnp.transpose(out_flat.reshape(N, H, W, Co), (0, 3, 1, 2))


def _reference(x, w_dw, w_pw):
    """Pure-JAX reference mirroring torch.nn.Conv2d semantics (NCHW)."""
    C = x.shape[1]
    dw = jax.lax.conv_general_dilated(
        x, w_dw[:, None, :, :],                 # (C, 1, 3, 3) OIHW
        window_strides=(1, 1), padding=((1, 1), (1, 1)),
        feature_group_count=C,
        dimension_numbers=("NCHW", "OIHW", "NCHW"))
    if w_pw is None:
        return dw
    return jax.lax.conv_general_dilated(
        dw, w_pw[:, :, None, None],             # (O, C, 1, 1) OIHW
        window_strides=(1, 1), padding=((0, 0), (0, 0)),
        dimension_numbers=("NCHW", "OIHW", "NCHW"))


if __name__ == "__main__":
    nin, nout = 4, 8
    N, H, W = 2, 16, 16

    key = jax.random.PRNGKey(0)
    kx, kdw, kpw = jax.random.split(key, 3)
    x = jax.random.normal(kx, (N, nin, H, W), jnp.float32)
    # torch Conv2d(nin, nin, 3, groups=nin, bias=False) weight: (nin, 1, 3, 3)
    w_dw = 0.1 * jax.random.normal(kdw, (nin, 3, 3), jnp.float32)
    # torch Conv2d(nin, nout, 1, bias=False) weight: (nout, nin, 1, 1)
    w_pw = 0.1 * jax.random.normal(kpw, (nout, nin), jnp.float32)

    # pointwise=True path (depthwise separable conv)
    out = jax.block_until_ready(dws_conv(x, w_dw, w_pw))
    ref = _reference(x, w_dw, w_pw)
    assert out.shape == (N, nout, H, W)
    assert jnp.allclose(out, ref, atol=1e-4, rtol=1e-4)

    # pointwise=False path (default module args: depthwise only)
    out_dw = jax.block_until_ready(dws_conv(x, w_dw, None))
    ref_dw = _reference(x, w_dw, None)
    assert out_dw.shape == (N, nin, H, W)
    assert jnp.allclose(out_dw, ref_dw, atol=1e-4, rtol=1e-4)

    print("KERNEL_OK")
</pallas_src>

<mosaic_0001>
module attributes {stable_mosaic.version = 11 : i64} {
  func.func @dws_kernel(%arg0: i32, %arg1: memref<1x16x16x4xf32, #tpu.memory_space<vmem>>, %arg2: memref<3x3x4xf32, #tpu.memory_space<vmem>>, %arg3: memref<4x8xf32, #tpu.memory_space<vmem>>, %arg4: memref<1x256x8xf32, #tpu.memory_space<vmem>>, %arg5: memref<18x32x4xf32, #tpu.memory_space<vmem>>) attributes {dimension_semantics = [#tpu.dimension_semantics<parallel>], iteration_bounds = array<i64: 2>, scalar_prefetch = 0 : i64, scratch_operands = 1 : i64, tpu.core_type = #tpu.core_type<tc>, window_params = [{transform_indices = @transform_0, window_bounds = array<i64: 1, 16, 16, 4>}, {pipeline_mode = #tpu.pipeline_mode<synchronous>, transform_indices = @transform_1, window_bounds = array<i64: 3, 3, 4>}, {pipeline_mode = #tpu.pipeline_mode<synchronous>, transform_indices = @transform_2, window_bounds = array<i64: 4, 8>}, {transform_indices = @transform_3, window_bounds = array<i64: 1, 256, 8>}]} {
    %cst = arith.constant 0.000000e+00 : f32
    %0 = vector.broadcast %cst : f32 to vector<18x32x4xf32>
    %c0 = arith.constant 0 : index
    %c0_0 = arith.constant 0 : index
    %c0_1 = arith.constant 0 : index
    %1 = vector.load %arg5[%c0, %c0_0, %c0_1] : memref<18x32x4xf32, #tpu.memory_space<vmem>>, vector<18x32x4xf32>
    tpu.vector_store %arg5[%c0, %c0_0, %c0_1], %0 {strides = array<i32>} : memref<18x32x4xf32, #tpu.memory_space<vmem>>, vector<18x32x4xf32>,
    %c0_2 = arith.constant 0 : index
    %c0_3 = arith.constant 0 : index
    %c0_4 = arith.constant 0 : index
    %c0_5 = arith.constant 0 : index
    %2 = vector.load %arg1[%c0_2, %c0_3, %c0_4, %c0_5] : memref<1x16x16x4xf32, #tpu.memory_space<vmem>>, vector<1x16x16x4xf32>
    %3 = vector.shape_cast %2 : vector<1x16x16x4xf32> to vector<16x16x4xf32>
    %c1 = arith.constant 1 : index
    %c8 = arith.constant 8 : index
    %c0_6 = arith.constant 0 : index
    %4 = vector.load %arg5[%c1, %c8, %c0_6] : memref<18x32x4xf32, #tpu.memory_space<vmem>>, vector<16x16x4xf32>
    tpu.vector_store %arg5[%c1, %c8, %c0_6], %3 {strides = array<i32>} : memref<18x32x4xf32, #tpu.memory_space<vmem>>, vector<16x16x4xf32>,
    %c0_7 = arith.constant 0 : index
    %c0_8 = arith.constant 0 : index
    %c0_9 = arith.constant 0 : index
    %5 = vector.load %arg2[%c0_7, %c0_8, %c0_9] : memref<3x3x4xf32, #tpu.memory_space<vmem>>, vector<3x3x4xf32>
    %cst_10 = arith.constant 0.000000e+00 : f32
    %6 = vector.broadcast %cst_10 : f32 to vector<16x16x4xf32>
    %c0_11 = arith.constant 0 : index
    %c7 = arith.constant 7 : index
    %c0_12 = arith.constant 0 : index
    %7 = vector.load %arg5[%c0_11, %c7, %c0_12] : memref<18x32x4xf32, #tpu.memory_space<vmem>>, vector<16x16x4xf32>
    %8 = vector.extract_strided_slice %5 {offsets = [0, 0, 0], sizes = [1, 1, 4], strides = [1, 1, 1]} : vector<3x3x4xf32> to vector<1x1x4xf32>
    %9 = vector.broadcast %8 : vector<1x1x4xf32> to vector<16x16x4xf32>
    %10 = arith.mulf %7, %9 : vector<16x16x4xf32>
    %11 = arith.addf %6, %10 : vector<16x16x4xf32>
    %c0_13 = arith.constant 0 : index
    %c8_14 = arith.constant 8 : index
    %c0_15 = arith.constant 0 : index
    %12 = vector.load %arg5[%c0_13, %c8_14, %c0_15] : memref<18x32x4xf32, #tpu.memory_space<vmem>>, vector<16x16x4xf32>
    %13 = vector.extract_strided_slice %5 {offsets = [0, 1, 0], sizes = [1, 1, 4], strides = [1, 1, 1]} : vector<3x3x4xf32> to vector<1x1x4xf32>
    %14 = vector.broadcast %13 : vector<1x1x4xf32> to vector<16x16x4xf32>
    %15 = arith.mulf %12, %14 : vector<16x16x4xf32>
    %16 = arith.addf %11, %15 : vector<16x16x4xf32>
    %c0_16 = arith.constant 0 : index
    %c9 = arith.constant 9 : index
    %c0_17 = arith.constant 0 : index
    %17 = vector.load %arg5[%c0_16, %c9, %c0_17] : memref<18x32x4xf32, #tpu.memory_space<vmem>>, vector<16x16x4xf32>
    %18 = vector.extract_strided_slice %5 {offsets = [0, 2, 0], sizes = [1, 1, 4], strides = [1, 1, 1]} : vector<3x3x4xf32> to vector<1x1x4xf32>
    %19 = vector.broadcast %18 : vector<1x1x4xf32> to vector<16x16x4xf32>
    %20 = arith.mulf %17, %19 : vector<16x16x4xf32>
    %21 = arith.addf %16, %20 : vector<16x16x4xf32>
    %c1_18 = arith.constant 1 : index
    %c7_19 = arith.constant 7 : index
    %c0_20 = arith.constant 0 : index
    %22 = vector.load %arg5[%c1_18, %c7_19, %c0_20] : memref<18x32x4xf32, #tpu.memory_space<vmem>>, vector<16x16x4xf32>
    %23 = vector.extract_strided_slice %5 {offsets = [1, 0, 0], sizes = [1, 1, 4], strides = [1, 1, 1]} : vector<3x3x4xf32> to vector<1x1x4xf32>
    %24 = vector.broadcast %23 : vector<1x1x4xf32> to vector<16x16x4xf32>
    %25 = arith.mulf %22, %24 : vector<16x16x4xf32>
    %26 = arith.addf %21, %25 : vector<16x16x4xf32>
    %c1_21 = arith.constant 1 : index
    %c8_22 = arith.constant 8 : index
    %c0_23 = arith.constant 0 : index
    %27 = vector.load %arg5[%c1_21, %c8_22, %c0_23] : memref<18x32x4xf32, #tpu.memory_space<vmem>>, vector<16x16x4xf32>
    %28 = vector.extract_strided_slice %5 {offsets = [1, 1, 0], sizes = [1, 1, 4], strides = [1, 1, 1]} : vector<3x3x4xf32> to vector<1x1x4xf32>
    %29 = vector.broadcast %28 : vector<1x1x4xf32> to vector<16x16x4xf32>
    %30 = arith.mulf %27, %29 : vector<16x16x4xf32>
    %31 = arith.addf %26, %30 : vector<16x16x4xf32>
    %c1_24 = arith.constant 1 : index
    %c9_25 = arith.constant 9 : index
    %c0_26 = arith.constant 0 : index
    %32 = vector.load %arg5[%c1_24, %c9_25, %c0_26] : memref<18x32x4xf32, #tpu.memory_space<vmem>>, vector<16x16x4xf32>
    %33 = vector.extract_strided_slice %5 {offsets = [1, 2, 0], sizes = [1, 1, 4], strides = [1, 1, 1]} : vector<3x3x4xf32> to vector<1x1x4xf32>
    %34 = vector.broadcast %33 : vector<1x1x4xf32> to vector<16x16x4xf32>
    %35 = arith.mulf %32, %34 : vector<16x16x4xf32>
    %36 = arith.addf %31, %35 : vector<16x16x4xf32>
    %c2 = arith.constant 2 : index
    %c7_27 = arith.constant 7 : index
    %c0_28 = arith.constant 0 : index
    %37 = vector.load %arg5[%c2, %c7_27, %c0_28] : memref<18x32x4xf32, #tpu.memory_space<vmem>>, vector<16x16x4xf32>
    %38 = vector.extract_strided_slice %5 {offsets = [2, 0, 0], sizes = [1, 1, 4], strides = [1, 1, 1]} : vector<3x3x4xf32> to vector<1x1x4xf32>
    %39 = vector.broadcast %38 : vector<1x1x4xf32> to vector<16x16x4xf32>
    %40 = arith.mulf %37, %39 : vector<16x16x4xf32>
    %41 = arith.addf %36, %40 : vector<16x16x4xf32>
    %c2_29 = arith.constant 2 : index
    %c8_30 = arith.constant 8 : index
    %c0_31 = arith.constant 0 : index
    %42 = vector.load %arg5[%c2_29, %c8_30, %c0_31] : memref<18x32x4xf32, #tpu.memory_space<vmem>>, vector<16x16x4xf32>
    %43 = vector.extract_strided_slice %5 {offsets = [2, 1, 0], sizes = [1, 1, 4], strides = [1, 1, 1]} : vector<3x3x4xf32> to vector<1x1x4xf32>
    %44 = vector.broadcast %43 : vector<1x1x4xf32> to vector<16x16x4xf32>
    %45 = arith.mulf %42, %44 : vector<16x16x4xf32>
    %46 = arith.addf %41, %45 : vector<16x16x4xf32>
    %c2_32 = arith.constant 2 : index
    %c9_33 = arith.constant 9 : index
    %c0_34 = arith.constant 0 : index
    %47 = vector.load %arg5[%c2_32, %c9_33, %c0_34] : memref<18x32x4xf32, #tpu.memory_space<vmem>>, vector<16x16x4xf32>
    %48 = vector.extract_strided_slice %5 {offsets = [2, 2, 0], sizes = [1, 1, 4], strides = [1, 1, 1]} : vector<3x3x4xf32> to vector<1x1x4xf32>
    %49 = vector.broadcast %48 : vector<1x1x4xf32> to vector<16x16x4xf32>
    %50 = arith.mulf %47, %49 : vector<16x16x4xf32>
    %51 = arith.addf %46, %50 : vector<16x16x4xf32>
    %c0_35 = arith.constant 0 : index
    %c0_36 = arith.constant 0 : index
    %52 = vector.load %arg3[%c0_35, %c0_36] : memref<4x8xf32, #tpu.memory_space<vmem>>, vector<4x8xf32>
    %53 = vector.shape_cast %51 : vector<16x16x4xf32> to vector<256x4xf32>
    %cst_37 = arith.constant dense<0.000000e+00> : vector<256x8xf32>
    %54 = tpu.matmul %53, %52, %cst_37 {dimension_numbers = #tpu.dot_dimension_numbers<[1], [0], [0], [1], [0, 0, 1, 1], [], []>} : vector<256x4xf32>, vector<4x8xf32>, vector<256x8xf32> -> vector<256x8xf32>
    %c0_38 = arith.constant 0 : index
    %c0_39 = arith.constant 0 : index
    %c0_40 = arith.constant 0 : index
    %55 = vector.load %arg4[%c0_38, %c0_39, %c0_40] : memref<1x256x8xf32, #tpu.memory_space<vmem>>, vector<1x256x8xf32>
    %56 = vector.shape_cast %55 : vector<1x256x8xf32> to vector<256x8xf32>
    %57 = vector.shape_cast %54 : vector<256x8xf32> to vector<1x256x8xf32>
    tpu.vector_store %arg4[%c0_38, %c0_39, %c0_40], %57 {strides = array<i32>} : memref<1x256x8xf32, #tpu.memory_space<vmem>>, vector<1x256x8xf32>,
    return
  }
  func.func @transform_0(%arg0: i32) -> (i32, i32, i32, i32) {
    %c0_i32 = arith.constant 0 : i32
    %c0_i32_0 = arith.constant 0 : i32
    %c0_i32_1 = arith.constant 0 : i32
    %c0_i32_2 = arith.constant 0 : i32
    return %arg0, %c0_i32, %c0_i32_0, %c0_i32_1 : i32, i32, i32, i32
  }
  func.func @transform_1(%arg0: i32) -> (i32, i32, i32) {
    %c0_i32 = arith.constant 0 : i32
    %c0_i32_0 = arith.constant 0 : i32
    %c0_i32_1 = arith.constant 0 : i32
    %c0_i32_2 = arith.constant 0 : i32
    return %c0_i32, %c0_i32_0, %c0_i32_1 : i32, i32, i32
  }
  func.func @transform_2(%arg0: i32) -> (i32, i32) {
    %c0_i32 = arith.constant 0 : i32
    %c0_i32_0 = arith.constant 0 : i32
    %c0_i32_1 = arith.constant 0 : i32
    return %c0_i32, %c0_i32_0 : i32, i32
  }
  func.func @transform_3(%arg0: i32) -> (i32, i32, i32) {
    %c0_i32 = arith.constant 0 : i32
    %c0_i32_0 = arith.constant 0 : i32
    %c0_i32_1 = arith.constant 0 : i32
    return %arg0, %c0_i32, %c0_i32_0 : i32, i32, i32
  }
}

</mosaic_0001>

<llo_original>
// kernel: tpu_custom_call.1
$region0: #{tpu_custom_call.1}
  #allocation0 [shape = 'u32[]', space=smem, size = 0x4, offset = 0x4, fixed_abs, tag = 'smem constant byte address 0x4 - core index']
  #allocation1 [shape = 'u32[144,128]{1,0:T(1,128)}', space=vmem, size = 0x12000, scoped, tag = 'internal scratch']
  #allocation2 [shape = 'f32[18,32,4]{2,1,0:T(8,128)}', space=vmem, size = 0x48000, scoped, tag = 'scratch operand']
  %s0 = inlined_call_operand.vmem [shape: f32[2,16,16,4], index: 0, kind: input, shape index: {}]
  %s1 = inlined_call_operand.vmem [shape: f32[3,3,4], index: 1, kind: input, shape index: {}]
  %s2 = inlined_call_operand.vmem [shape: f32[4,8], index: 2, kind: input, shape index: {}]
  %s3 = inlined_call_operand.vmem [shape: f32[2,256,8], index: 3, kind: output, shape index: {}]
  %s4 = sld [smem:[#allocation0]]
  $region45: #{tpu_custom_call.1} parent=0
    _
  %s6 = ssub.s32 1, %s4
  %s7 = scalar_select 0, %s6, %s4
  loop: start=0, step=1, limit=4
  $region2: #{tpu_custom_call.1} parent=0 // loop_pre_header
    _
  $region3: #{tpu_custom_call.1} parent=0 // loop_header
    %s9 = sphi 0, %s13
    %p10 = scmp.ge.s32.totalorder %s9, 4
    %s19 = sphi 0, %s21
    %s22 = sphi 0, %s19
    %s23 = sphi 0, %s22
    %s39 = sphi 0, %s23
    %s43 = sphi 0, %s43
    %s45 = sphi 0, %s43
    %s46 = sphi 0, %s45
    %s60 = sphi 0, %s46
    %s64 = sphi 0, %s64
    %s66 = sphi 0, %s64
    %s67 = sphi 0, %s66
    %s81 = sphi 0, %s67
    %s87 = sphi 0, %s89
    %s90 = sphi 0, %s87
    %s91 = sphi 0, %s90
    %s107 = sphi 0, %s91
  $region4: #{tpu_custom_call.1} parent=0 // loop_header_branch
    %12 = sbr.rel (%p10) target = $region8
  $region5: #{tpu_custom_call.1} parent=0 // loop_body
    %s14 = ssub.s32 %s9, 1
    %s15 = ssub.s32 %s9, 2
    %s16 = sadd.s32 %s9, 1
    %s17 = ssub.s32 %s9, %s16
    %p18 = scmp.eq.s32.totalorder %s17, 0
    %s20 = sadd.s32 %s19, 1
    %s21 = scalar_select %p18, %s19, %s20
    %p24 = pneg %p18
    %p25 = scmp.eq.s32.totalorder %s9, 1
    %p26 = por %p24, %p25
    %p27 = scmp.ne.s32.totalorder %s19, %s22
    %p28 = scmp.eq.s32.totalorder %s9, 0
    %p29 = por %p27, %p28
    %p30 = scmp.ne.s32.totalorder %s19, %s22
    %p31 = scmp.eq.s32.totalorder %s14, 1
    %p32 = por %p30, %p31
    %p33 = scmp.ne.s32.totalorder %s22, %s23
    %p34 = scmp.eq.s32.totalorder %s14, 0
    %p35 = por %p33, %p34
    %p36 = scmp.ne.s32.totalorder %s22, %s23
    %p37 = scmp.eq.s32.totalorder %s15, 1
    %p38 = por %p36, %p37
    %p40 = scmp.ne.s32.totalorder %s23, %s39
    %p41 = scmp.eq.s32.totalorder %s15, 0
    %p42 = por %p40, %p41
    %s44 = sadd.s32 %s43, 1
    %p47 = scmp.eq.s32.totalorder %s9, 1
    %p48 = scmp.ne.s32.totalorder %s43, %s45
    %p49 = scmp.eq.s32.totalorder %s9, 0
    %p50 = por %p48, %p49
    %p51 = scmp.ne.s32.totalorder %s43, %s45
    %p52 = scmp.eq.s32.totalorder %s14, 1
    %p53 = por %p51, %p52
    %p54 = scmp.ne.s32.totalorder %s45, %s46
    %p55 = scmp.eq.s32.totalorder %s14, 0
    %p56 = por %p54, %p55
    %p57 = scmp.ne.s32.totalorder %s45, %s46
    %p58 = scmp.eq.s32.totalorder %s15, 1
    %p59 = por %p57, %p58
    %p61 = scmp.ne.s32.totalorder %s46, %s60
    %p62 = scmp.eq.s32.totalorder %s15, 0
    %p63 = por %p61, %p62
    %s65 = sadd.s32 %s64, 1
    %p68 = scmp.eq.s32.totalorder %s9, 1
    %p69 = scmp.ne.s32.totalorder %s64, %s66
    %p70 = scmp.eq.s32.totalorder %s9, 0
    %p71 = por %p69, %p70
    %p72 = scmp.ne.s32.totalorder %s64, %s66
    %p73 = scmp.eq.s32.totalorder %s14, 1
    %p74 = por %p72, %p73
    %p75 = scmp.ne.s32.totalorder %s66, %s67
    %p76 = scmp.eq.s32.totalorder %s14, 0
    %p77 = por %p75, %p76
    %p78 = scmp.ne.s32.totalorder %s66, %s67
    %p79 = scmp.eq.s32.totalorder %s15, 1
    %p80 = por %p78, %p79
    %p82 = scmp.ne.s32.totalorder %s67, %s81
    %p83 = scmp.eq.s32.totalorder %s15, 0
    %p84 = por %p82, %p83
    %s85 = ssub.s32 %s9, %s16
    %p86 = scmp.eq.s32.totalorder %s85, 0
    %s88 = sadd.s32 %s87, 1
    %s89 = scalar_select %p86, %s87, %s88
    %p92 = pneg %p86
    %p93 = scmp.eq.s32.totalorder %s9, 1
    %p94 = por %p92, %p93
    %p95 = scmp.ne.s32.totalorder %s87, %s90
    %p96 = scmp.eq.s32.totalorder %s9, 0
    %p97 = por %p95, %p96
    %p98 = scmp.ne.s32.totalorder %s87, %s90
    %p99 = scmp.eq.s32.totalorder %s14, 1
    %p100 = por %p98, %p99
    %p101 = scmp.ne.s32.totalorder %s90, %s91
    %p102 = scmp.eq.s32.totalorder %s14, 0
    %p103 = por %p101, %p102
    %p104 = scmp.ne.s32.totalorder %s90, %s91
    %p105 = scmp.eq.s32.totalorder %s15, 1
    %p106 = por %p104, %p105
    %p108 = scmp.ne.s32.totalorder %s91, %s107
    %p109 = scmp.eq.s32.totalorder %s15, 0
    %p110 = por %p108, %p109
    %p111 = scmp.le.s32.totalorder 1, %s9
    %p112 = scmp.lt.s32.totalorder %s9, 3
    %p113 = pnand %p111, %p112
    %p114 = pneg %p113
    // Predicated region
    $region9: #{tpu_custom_call.1} parent=5 // pred_check
      _
    $region10: #{tpu_custom_call.1} parent=5 // pred_check_branch
      %116 = sbr.rel (%p113) target = $region12
    $region11: #{tpu_custom_call.1} parent=5 // pred_region
      %s117 = ssub.s32 %s9, 1
      // Predicated region
      $region13: #{tpu_custom_call.1} parent=11 // pred_check
        %p118 = pneg %p56
      $region14: #{tpu_custom_call.1} parent=11 // pred_check_branch
        %120 = sbr.rel (%p118) target = $region16
      $region15: #{tpu_custom_call.1} parent=11 // pred_region
        _
      $region16: #{tpu_custom_call.1} parent=11 // pred_fallthru
        _
      // Predicated region
      $region17: #{tpu_custom_call.1} parent=11 // pred_check
        %p121 = pneg %p77
      $region18: #{tpu_custom_call.1} parent=11 // pred_check_branch
        %123 = sbr.rel (%p121) target = $region20
      $region19: #{tpu_custom_call.1} parent=11 // pred_region
        _
      $region20: #{tpu_custom_call.1} parent=11 // pred_fallthru
        _
    $region12: #{tpu_custom_call.1} parent=5 // pred_fallthru
      _
    %p124 = scmp.lt.s32.totalorder %s9, 2
    // Predicated region
    $region21: #{tpu_custom_call.1} parent=5 // pred_check
      %p125 = pneg %p124
    $region22: #{tpu_custom_call.1} parent=5 // pred_check_branch
      %127 = sbr.rel (%p125) target = $region24
    $region23: #{tpu_custom_call.1} parent=5 // pred_region
      // Predicated region
      $region25: #{tpu_custom_call.1} parent=23 // pred_check
        %p128 = pneg %p29
      $region26: #{tpu_custom_call.1} parent=23 // pred_check_branch
        %130 = sbr.rel (%p128) target = $region28
      $region27: #{tpu_custom_call.1} parent=23 // pred_region
        %p131 = scmp.lt.s32.totalorder %s9, 1
        %s132 = scalar_select %p131, %s9, 1
        %s133 = smul.addr %s132, 32
        %s134 = smul.addr %s133, 8
        %s135 = scalar_lea.vmem %s0, %s134
      $region28: #{tpu_custom_call.1} parent=23 // pred_fallthru
        _
    $region24: #{tpu_custom_call.1} parent=5 // pred_fallthru
      _
    %p136 = scmp.le.s32.totalorder 1, %s9
    %p137 = scmp.lt.s32.totalorder %s9, 3
    %p138 = pnand %p136, %p137
    %p139 = pneg %p138
    // Predicated region
    $region29: #{tpu_custom_call.1} parent=5 // pred_check
      _
    $region30: #{tpu_custom_call.1} parent=5 // pred_check_branch
      %141 = sbr.rel (%p138) target = $region32
    $region31: #{tpu_custom_call.1} parent=5 // pred_region
      %s142 = ssub.s32 %s9, 1
      %p143 = scmp.lt.s32.totalorder %s14, 1
      %s144 = scalar_select %p143, %s14, 1
      %s145 = smul.addr %s144, 32
      %s146 = smul.addr %s145, 8
      %s147 = scalar_lea.vmem %s0, %s146
      %p148 = pneg %p35
      %p149 = pneg %p32
      %p150 = pneg %p56
      %p151 = pneg %p53
      %p152 = pneg %p77
      %p153 = pneg %p74
      %p154 = pneg %p103
      %p155 = pneg %p100
      %p156 = scmp.lt.s32.totalorder %s14, 1
      %s157 = scalar_select %p156, %s14, 1
      %s158 = smul.addr %s157, 32
      %s159 = smul.addr %s158, 8
      %s160 = scalar_lea.vmem %s3, %s159
      %p161 = scmp.lt.s32.totalorder %s14, 1
      %s162 = scalar_select %p161, %s14, 1
      %s163 = smul.addr %s162, 32
      %s164 = smul.addr %s163, 8
      %s165 = scalar_lea.vmem %s0, %s164
      %p166 = scmp.lt.s32.totalorder %s14, 1
      %s167 = scalar_select %p166, %s14, 1
      %s168 = smul.addr %s167, 32
      %s169 = smul.addr %s168, 8
      %s170 = scalar_lea.vmem %s3, %s169
      %vm171 = vcmask 31744
      %172 = vst.msk [vmem:[#allocation2] sm:$0xff] %vm171, 0.0
      %173 = vst.msk [vmem:[#allocation2 + $0x8] sm:$0xff] %vm171, 0.0
      %174 = vst.msk [vmem:[#allocation2 + $0x10] sm:$0xff] %vm171, 0.0
      %175 = vst.msk [vmem:[#allocation2 + $0x18] sm:$0xff] %vm171, 0.0
      %176 = vst.msk [vmem:[#allocation2 + $0x20] sm:$0xff] %vm171, 0.0
      %177 = vst.msk [vmem:[#allocation2 + $0x28] sm:$0xff] %vm171, 0.0
      %178 = vst.msk [vmem:[#allocation2 + $0x30] sm:$0xff] %vm171, 0.0
      %179 = vst.msk [vmem:[#allocation2 + $0x38] sm:$0xff] %vm171, 0.0
      %180 = vst.msk [vmem:[#allocation2 + $0x40] sm:$0xff] %vm171, 0.0
      %181 = vst.msk [vmem:[#allocation2 + $0x48] sm:$0xff] %vm171, 0.0
      %182 = vst.msk [vmem:[#allocation2 + $0x50] sm:$0xff] %vm171, 0.0
      %183 = vst.msk [vmem:[#allocation2 + $0x58] sm:$0xff] %vm171, 0.0
      %184 = vst.msk [vmem:[#allocation2 + $0x60] sm:$0xff] %vm171, 0.0
      %185 = vst.msk [vmem:[#allocation2 + $0x68] sm:$0xff] %vm171, 0.0
      %186 = vst.msk [vmem:[#allocation2 + $0x70] sm:$0xff] %vm171, 0.0
      %187 = vst.msk [vmem:[#allocation2 + $0x78] sm:$0xff] %vm171, 0.0
      %188 = vst.msk [vmem:[#allocation2 + $0x80] sm:$0xff] %vm171, 0.0
      %189 = vst.msk [vmem:[#allocation2 + $0x88] sm:$0xff] %vm171, 0.0
      %190 = vst.msk [vmem:[#allocation2 + $0x90] sm:$0xff] %vm171, 0.0
      %191 = vst.msk [vmem:[#allocation2 + $0x98] sm:$0xff] %vm171, 0.0
      %192 = vst.msk [vmem:[#allocation2 + $0xa0] sm:$0xff] %vm171, 0.0
      %193 = vst.msk [vmem:[#allocation2 + $0xa8] sm:$0xff] %vm171, 0.0
      %194 = vst.msk [vmem:[#allocation2 + $0xb0] sm:$0xff] %vm171, 0.0
      %195 = vst.msk [vmem:[#allocation2 + $0xb8] sm:$0xff] %vm171, 0.0
      %196 = vst.msk [vmem:[#allocation2 + $0xc0] sm:$0xff] %vm171, 0.0
      %197 = vst.msk [vmem:[#allocation2 + $0xc8] sm:$0xff] %vm171, 0.0
      %198 = vst.msk [vmem:[#allocation2 + $0xd0] sm:$0xff] %vm171, 0.0
      %199 = vst.msk [vmem:[#allocation2 + $0xd8] sm:$0xff] %vm171, 0.0
      %200 = vst.msk [vmem:[#allocation2 + $0xe0] sm:$0xff] %vm171, 0.0
      %201 = vst.msk [vmem:[#allocation2 + $0xe8] sm:$0xff] %vm171, 0.0
      %202 = vst.msk [vmem:[#allocation2 + $0xf0] sm:$0xff] %vm171, 0.0
      %203 = vst.msk [vmem:[#allocation2 + $0xf8] sm:$0xff] %vm171, 0.0
      %204 = vst.msk [vmem:[#allocation2 + $0x100] sm:$0xff] %vm171, 0.0
      %205 = vst.msk [vmem:[#allocation2 + $0x108] sm:$0xff] %vm171, 0.0
      %206 = vst.msk [vmem:[#allocation2 + $0x110] sm:$0xff] %vm171, 0.0
      %207 = vst.msk [vmem:[#allocation2 + $0x118] sm:$0xff] %vm171, 0.0
      %208 = vst.msk [vmem:[#allocation2 + $0x120] sm:$0xff] %vm171, 0.0
      %209 = vst.msk [vmem:[#allocation2 + $0x128] sm:$0xff] %vm171, 0.0
      %210 = vst.msk [vmem:[#allocation2 + $0x130] sm:$0xff] %vm171, 0.0
      %211 = vst.msk [vmem:[#allocation2 + $0x138] sm:$0xff] %vm171, 0.0
      %212 = vst.msk [vmem:[#allocation2 + $0x140] sm:$0xff] %vm171, 0.0
      %213 = vst.msk [vmem:[#allocation2 + $0x148] sm:$0xff] %vm171, 0.0
      %214 = vst.msk [vmem:[#allocation2 + $0x150] sm:$0xff] %vm171, 0.0
      %215 = vst.msk [vmem:[#allocation2 + $0x158] sm:$0xff] %vm171, 0.0
      %216 = vst.msk [vmem:[#allocation2 + $0x160] sm:$0xff] %vm171, 0.0
      %217 = vst.msk [vmem:[#allocation2 + $0x168] sm:$0xff] %vm171, 0.0
      %218 = vst.msk [vmem:[#allocation2 + $0x170] sm:$0xff] %vm171, 0.0
      %219 = vst.msk [vmem:[#allocation2 + $0x178] sm:$0xff] %vm171, 0.0
      %220 = vst.msk [vmem:[#allocation2 + $0x180] sm:$0xff] %vm171, 0.0
      %221 = vst.msk [vmem:[#allocation2 + $0x188] sm:$0xff] %vm171, 0.0
      %222 = vst.msk [vmem:[#allocation2 + $0x190] sm:$0xff] %vm171, 0.0
      %223 = vst.msk [vmem:[#allocation2 + $0x198] sm:$0xff] %vm171, 0.0
      %224 = vst.msk [vmem:[#allocation2 + $0x1a0] sm:$0xff] %vm171, 0.0
      %225 = vst.msk [vmem:[#allocation2 + $0x1a8] sm:$0xff] %vm171, 0.0
      %226 = vst.msk [vmem:[#allocation2 + $0x1b0] sm:$0xff] %vm171, 0.0
      %227 = vst.msk [vmem:[#allocation2 + $0x1b8] sm:$0xff] %vm171, 0.0
      %228 = vst.msk [vmem:[#allocation2 + $0x1c0] sm:$0xff] %vm171, 0.0
      %229 = vst.msk [vmem:[#allocation2 + $0x1c8] sm:$0xff] %vm171, 0.0
      %230 = vst.msk [vmem:[#allocation2 + $0x1d0] sm:$0xff] %vm171, 0.0
      %231 = vst.msk [vmem:[#allocation2 + $0x1d8] sm:$0xff] %vm171, 0.0
      %232 = vst.msk [vmem:[#allocation2 + $0x1e0] sm:$0xff] %vm171, 0.0
      %233 = vst.msk [vmem:[#allocation2 + $0x1e8] sm:$0xff] %vm171, 0.0
      %234 = vst.msk [vmem:[#allocation2 + $0x1f0] sm:$0xff] %vm171, 0.0
      %235 = vst.msk [vmem:[#allocation2 + $0x1f8] sm:$0xff] %vm171, 0.0
      %236 = vst.msk [vmem:[#allocation2 + $0x200] sm:$0xff] %vm171, 0.0
      %237 = vst.msk [vmem:[#allocation2 + $0x208] sm:$0xff] %vm171, 0.0
      %238 = vst.msk [vmem:[#allocation2 + $0x210] sm:$0xff] %vm171, 0.0
      %239 = vst.msk [vmem:[#allocation2 + $0x218] sm:$0xff] %vm171, 0.0
      %240 = vst.msk [vmem:[#allocation2 + $0x220] sm:$0xff] %vm171, 0.0
      %241 = vst.msk [vmem:[#allocation2 + $0x228] sm:$0xff] %vm171, 0.0
      %242 = vst.msk [vmem:[#allocation2 + $0x230] sm:$0xff] %vm171, 0.0
      %243 = vst.msk [vmem:[#allocation2 + $0x238] sm:$0xff] %vm171, 0.0
      %v244 = vld [vmem:[%s165] sm:$0xff]
      %v245 = vld [vmem:[%s165 + $0x8] sm:$0xff]
      %v246 = vld [vmem:[%s165 + $0x10] sm:$0xff]
      %v247 = vld [vmem:[%s165 + $0x18] sm:$0xff]
      %v248 = vld [vmem:[%s165 + $0x20] sm:$0xff]
      %v249 = vld [vmem:[%s165 + $0x28] sm:$0xff]
      %v250 = vld [vmem:[%s165 + $0x30] sm:$0xff]
      %v251 = vld [vmem:[%s165 + $0x38] sm:$0xff]
      %v252 = vld [vmem:[%s165 + $0x40] sm:$0xff]
      %v253 = vld [vmem:[%s165 + $0x48] sm:$0xff]
      %v254 = vld [vmem:[%s165 + $0x50] sm:$0xff]
      %v255 = vld [vmem:[%s165 + $0x58] sm:$0xff]
      %v256 = vld [vmem:[%s165 + $0x60] sm:$0xff]
      %v257 = vld [vmem:[%s165 + $0x68] sm:$0xff]
      %v258 = vld [vmem:[%s165 + $0x70] sm:$0xff]
      %v259 = vld [vmem:[%s165 + $0x78] sm:$0xff]
      %v260 = vld [vmem:[%s165 + $0x80] sm:$0xff]
      %v261 = vld [vmem:[%s165 + $0x88] sm:$0xff]
      %v262 = vld [vmem:[%s165 + $0x90] sm:$0xff]
      %v263 = vld [vmem:[%s165 + $0x98] sm:$0xff]
      %v264 = vld [vmem:[%s165 + $0xa0] sm:$0xff]
      %v265 = vld [vmem:[%s165 + $0xa8] sm:$0xff]
      %v266 = vld [vmem:[%s165 + $0xb0] sm:$0xff]
      %v267 = vld [vmem:[%s165 + $0xb8] sm:$0xff]
      %v268 = vld [vmem:[%s165 + $0xc0] sm:$0xff]
      %v269 = vld [vmem:[%s165 + $0xc8] sm:$0xff]
      %v270 = vld [vmem:[%s165 + $0xd0] sm:$0xff]
      %v271 = vld [vmem:[%s165 + $0xd8] sm:$0xff]
      %v272 = vld [vmem:[%s165 + $0xe0] sm:$0xff]
      %v273 = vld [vmem:[%s165 + $0xe8] sm:$0xff]
      %v274 = vld [vmem:[%s165 + $0xf0] sm:$0xff]
      %v275 = vld [vmem:[%s165 + $0xf8] sm:$0xff]
      %s276 = scalar_lea.vmem [#allocation2], 32
      %277 = vst.msk [vmem:[%s276 + $0x8] sm:$0xff] %vm171, %v244
      %278 = vst.msk [vmem:[%s276 + $0x10] sm:$0xff] %vm171, %v245
      %279 = vst.msk [vmem:[%s276 + $0x28] sm:$0xff] %vm171, %v246
      %280 = vst.msk [vmem:[%s276 + $0x30] sm:$0xff] %vm171, %v247
      %281 = vst.msk [vmem:[%s276 + $0x48] sm:$0xff] %vm171, %v248
      %282 = vst.msk [vmem:[%s276 + $0x50] sm:$0xff] %vm171, %v249
      %283 = vst.msk [vmem:[%s276 + $0x68] sm:$0xff] %vm171, %v250
      %284 = vst.msk [vmem:[%s276 + $0x70] sm:$0xff] %vm171, %v251
      %285 = vst.msk [vmem:[%s276 + $0x88] sm:$0xff] %vm171, %v252
      %286 = vst.msk [vmem:[%s276 + $0x90] sm:$0xff] %vm171, %v253
      %287 = vst.msk [vmem:[%s276 + $0xa8] sm:$0xff] %vm171, %v254
      %288 = vst.msk [vmem:[%s276 + $0xb0] sm:$0xff] %vm171, %v255
      %289 = vst.msk [vmem:[%s276 + $0xc8] sm:$0xff] %vm171, %v256
      %290 = vst.msk [vmem:[%s276 + $0xd0] sm:$0xff] %vm171, %v257
      %291 = vst.msk [vmem:[%s276 + $0xe8] sm:$0xff] %vm171, %v258
      %292 = vst.msk [vmem:[%s276 + $0xf0] sm:$0xff] %vm171, %v259
      %293 = vst.msk [vmem:[%s276 + $0x108] sm:$0xff] %vm171, %v260
      %294 = vst.msk [vmem:[%s276 + $0x110] sm:$0xff] %vm171, %v261
      %295 = vst.msk [vmem:[%s276 + $0x128] sm:$0xff] %vm171, %v262
      %296 = vst.msk [vmem:[%s276 + $0x130] sm:$0xff] %vm171, %v263
      %297 = vst.msk [vmem:[%s276 + $0x148] sm:$0xff] %vm171, %v264
      %298 = vst.msk [vmem:[%s276 + $0x150] sm:$0xff] %vm171, %v265
      %299 = vst.msk [vmem:[%s276 + $0x168] sm:$0xff] %vm171, %v266
      %300 = vst.msk [vmem:[%s276 + $0x170] sm:$0xff] %vm171, %v267
      %301 = vst.msk [vmem:[%s276 + $0x188] sm:$0xff] %vm171, %v268
      %302 = vst.msk [vmem:[%s276 + $0x190] sm:$0xff] %vm171, %v269
      %303 = vst.msk [vmem:[%s276 + $0x1a8] sm:$0xff] %vm171, %v270
      %304 = vst.msk [vmem:[%s276 + $0x1b0] sm:$0xff] %vm171, %v271
      %305 = vst.msk [vmem:[%s276 + $0x1c8] sm:$0xff] %vm171, %v272
      %306 = vst.msk [vmem:[%s276 + $0x1d0] sm:$0xff] %vm171, %v273
      %307 = vst.msk [vmem:[%s276 + $0x1e8] sm:$0xff] %vm171, %v274
      %308 = vst.msk [vmem:[%s276 + $0x1f0] sm:$0xff] %vm171, %v275
      %v309 = vld [vmem:[%s1] sm:$0x7]
      %v310 = vld [vmem:[%s1 + $0x4] sm:$0x7]
      %v311 = vld [vmem:[%s1 + $0x8] sm:$0x7]
      %v312 = vld [vmem:[#allocation2 + $0x7] sm:$0xff]
      %v313 = vld [vmem:[#allocation2 + $0xf] sm:$0xff]
      %v314 = vld [vmem:[#allocation2 + $0x27] sm:$0xff]
      %v315 = vld [vmem:[#allocation2 + $0x2f] sm:$0xff]
      %v316 = vld [vmem:[#allocation2 + $0x47] sm:$0xff]
      %v317 = vld [vmem:[#allocation2 + $0x4f] sm:$0xff]
      %v318 = vld [vmem:[#allocation2 + $0x67] sm:$0xff]
      %v319 = vld [vmem:[#allocation2 + $0x6f] sm:$0xff]
      %v320 = vld [vmem:[#allocation2 + $0x87] sm:$0xff]
      %v321 = vld [vmem:[#allocation2 + $0x8f] sm:$0xff]
      %v322 = vld [vmem:[#allocation2 + $0xa7] sm:$0xff]
      %v323 = vld [vmem:[#allocation2 + $0xaf] sm:$0xff]
      %v324 = vld [vmem:[#allocation2 + $0xc7] sm:$0xff]
      %v325 = vld [vmem:[#allocation2 + $0xcf] sm:$0xff]
      %v326 = vld [vmem:[#allocation2 + $0xe7] sm:$0xff]
      %v327 = vld [vmem:[#allocation2 + $0xef] sm:$0xff]
      %v328 = vld [vmem:[#allocation2 + $0x107] sm:$0xff]
      %v329 = vld [vmem:[#allocation2 + $0x10f] sm:$0xff]
      %v330 = vld [vmem:[#allocation2 + $0x127] sm:$0xff]
      %v331 = vld [vmem:[#allocation2 + $0x12f] sm:$0xff]
      %v332 = vld [vmem:[#allocation2 + $0x147] sm:$0xff]
      %v333 = vld [vmem:[#allocation2 + $0x14f] sm:$0xff]
      %v334 = vld [vmem:[#allocation2 + $0x167] sm:$0xff]
      %v335 = vld [vmem:[#allocation2 + $0x16f] sm:$0xff]
      %v336 = vld [vmem:[#allocation2 + $0x187] sm:$0xff]
      %v337 = vld [vmem:[#allocation2 + $0x18f] sm:$0xff]
      %v338 = vld [vmem:[#allocation2 + $0x1a7] sm:$0xff]
      %v339 = vld [vmem:[#allocation2 + $0x1af] sm:$0xff]
      %v340 = vld [vmem:[#allocation2 + $0x1c7] sm:$0xff]
      %v341 = vld [vmem:[#allocation2 + $0x1cf] sm:$0xff]
      %v342 = vld [vmem:[#allocation2 + $0x1e7] sm:$0xff]
      %v343 = vld [vmem:[#allocation2 + $0x1ef] sm:$0xff]
      %v344 = vlaneseq
      %v345 = vshrl.u32 %v344, 7
      %v346 = vsub.s32 0, %v345
      %v347 = vrot.slane %v309, %v346
      %v348 = vmul.f32 %v312, %v347
      %v349 = vmul.f32 %v313, %v347
      %v350 = vmul.f32 %v314, %v347
      %v351 = vmul.f32 %v315, %v347
      %v352 = vmul.f32 %v316, %v347
      %v353 = vmul.f32 %v317, %v347
      %v354 = vmul.f32 %v318, %v347
      %v355 = vmul.f32 %v319, %v347
      %v356 = vmul.f32 %v320, %v347
      %v357 = vmul.f32 %v321, %v347
      %v358 = vmul.f32 %v322, %v347
      %v359 = vmul.f32 %v323, %v347
      %v360 = vmul.f32 %v324, %v347
      %v361 = vmul.f32 %v325, %v347
      %v362 = vmul.f32 %v326, %v347
      %v363 = vmul.f32 %v327, %v347
      %v364 = vmul.f32 %v328, %v347
      %v365 = vmul.f32 %v329, %v347
      %v366 = vmul.f32 %v330, %v347
      %v367 = vmul.f32 %v331, %v347
      %v368 = vmul.f32 %v332, %v347
      %v369 = vmul.f32 %v333, %v347
      %v370 = vmul.f32 %v334, %v347
      %v371 = vmul.f32 %v335, %v347
      %v372 = vmul.f32 %v336, %v347
      %v373 = vmul.f32 %v337, %v347
      %v374 = vmul.f32 %v338, %v347
      %v375 = vmul.f32 %v339, %v347
      %v376 = vmul.f32 %v340, %v347
      %v377 = vmul.f32 %v341, %v347
      %v378 = vmul.f32 %v342, %v347
      %v379 = vmul.f32 %v343, %v347
      %v380 = vadd.f32 %v348, 0.0
      %v381 = vadd.f32 %v349, 0.0
      %v382 = vadd.f32 %v350, 0.0
      %v383 = vadd.f32 %v351, 0.0
      %v384 = vadd.f32 %v352, 0.0
      %v385 = vadd.f32 %v353, 0.0
      %v386 = vadd.f32 %v354, 0.0
      %v387 = vadd.f32 %v355, 0.0
      %v388 = vadd.f32 %v356, 0.0
      %v389 = vadd.f32 %v357, 0.0
      %v390 = vadd.f32 %v358, 0.0
      %v391 = vadd.f32 %v359, 0.0
      %v392 = vadd.f32 %v360, 0.0
      %v393 = vadd.f32 %v361, 0.0
      %v394 = vadd.f32 %v362, 0.0
      %v395 = vadd.f32 %v363, 0.0
      %v396 = vadd.f32 %v364, 0.0
      %v397 = vadd.f32 %v365, 0.0
      %v398 = vadd.f32 %v366, 0.0
      %v399 = vadd.f32 %v367, 0.0
      %v400 = vadd.f32 %v368, 0.0
      %v401 = vadd.f32 %v369, 0.0
      %v402 = vadd.f32 %v370, 0.0
      %v403 = vadd.f32 %v371, 0.0
      %v404 = vadd.f32 %v372, 0.0
      %v405 = vadd.f32 %v373, 0.0
      %v406 = vadd.f32 %v374, 0.0
      %v407 = vadd.f32 %v375, 0.0
      %v408 = vadd.f32 %v376, 0.0
      %v409 = vadd.f32 %v377, 0.0
      %v410 = vadd.f32 %v378, 0.0
      %v411 = vadd.f32 %v379, 0.0
      %v412 = vld [vmem:[#allocation2 + $0x8] sm:$0xff]
      %v413 = vld [vmem:[#allocation2 + $0x10] sm:$0xff]
      %v414 = vld [vmem:[#allocation2 + $0x28] sm:$0xff]
      %v415 = vld [vmem:[#allocation2 + $0x30] sm:$0xff]
      %v416 = vld [vmem:[#allocation2 + $0x48] sm:$0xff]
      %v417 = vld [vmem:[#allocation2 + $0x50] sm:$0xff]
      %v418 = vld [vmem:[#allocation2 + $0x68] sm:$0xff]
      %v419 = vld [vmem:[#allocation2 + $0x70] sm:$0xff]
      %v420 = vld [vmem:[#allocation2 + $0x88] sm:$0xff]
      %v421 = vld [vmem:[#allocation2 + $0x90] sm:$0xff]
      %v422 = vld [vmem:[#allocation2 + $0xa8] sm:$0xff]
      %v423 = vld [vmem:[#allocation2 + $0xb0] sm:$0xff]
      %v424 = vld [vmem:[#allocation2 + $0xc8] sm:$0xff]
      %v425 = vld [vmem:[#allocation2 + $0xd0] sm:$0xff]
      %v426 = vld [vmem:[#allocation2 + $0xe8] sm:$0xff]
      %v427 = vld [vmem:[#allocation2 + $0xf0] sm:$0xff]
      %v428 = vld [vmem:[#allocation2 + $0x108] sm:$0xff]
      %v429 = vld [vmem:[#allocation2 + $0x110] sm:$0xff]
      %v430 = vld [vmem:[#allocation2 + $0x128] sm:$0xff]
      %v431 = vld [vmem:[#allocation2 + $0x130] sm:$0xff]
      %v432 = vld [vmem:[#allocation2 + $0x148] sm:$0xff]
      %v433 = vld [vmem:[#allocation2 + $0x150] sm:$0xff]
      %v434 = vld [vmem:[#allocation2 + $0x168] sm:$0xff]
      %v435 = vld [vmem:[#allocation2 + $0x170] sm:$0xff]
      %v436 = vld [vmem:[#allocation2 + $0x188] sm:$0xff]
      %v437 = vld [vmem:[#allocation2 + $0x190] sm:$0xff]
      %v438 = vld [vmem:[#allocation2 + $0x1a8] sm:$0xff]
      %v439 = vld [vmem:[#allocation2 + $0x1b0] sm:$0xff]
      %v440 = vld [vmem:[#allocation2 + $0x1c8] sm:$0xff]
      %v441 = vld [vmem:[#allocation2 + $0x1d0] sm:$0xff]
      %v442 = vld [vmem:[#allocation2 + $0x1e8] sm:$0xff]
      %v443 = vld [vmem:[#allocation2 + $0x1f0] sm:$0xff]
      %v444 = vlaneseq
      %v445 = vshrl.u32 %v444, 7
      %v446 = vsub.s32 1, %v445
      %v447 = vrot.slane %v309, %v446
      %v448 = vmul.f32 %v412, %v447
      %v449 = vmul.f32 %v413, %v447
      %v450 = vmul.f32 %v414, %v447
      %v451 = vmul.f32 %v415, %v447
      %v452 = vmul.f32 %v416, %v447
      %v453 = vmul.f32 %v417, %v447
      %v454 = vmul.f32 %v418, %v447
      %v455 = vmul.f32 %v419, %v447
      %v456 = vmul.f32 %v420, %v447
      %v457 = vmul.f32 %v421, %v447
      %v458 = vmul.f32 %v422, %v447
      %v459 = vmul.f32 %v423, %v447
      %v460 = vmul.f32 %v424, %v447
      %v461 = vmul.f32 %v425, %v447
      %v462 = vmul.f32 %v426, %v447
      %v463 = vmul.f32 %v427, %v447
      %v464 = vmul.f32 %v428, %v447
      %v465 = vmul.f32 %v429, %v447
      %v466 = vmul.f32 %v430, %v447
      %v467 = vmul.f32 %v431, %v447
      %v468 = vmul.f32 %v432, %v447
      %v469 = vmul.f32 %v433, %v447
      %v470 = vmul.f32 %v434, %v447
      %v471 = vmul.f32 %v435, %v447
      %v472 = vmul.f32 %v436, %v447
      %v473 = vmul.f32 %v437, %v447
      %v474 = vmul.f32 %v438, %v447
      %v475 = vmul.f32 %v439, %v447
      %v476 = vmul.f32 %v440, %v447
      %v477 = vmul.f32 %v441, %v447
      %v478 = vmul.f32 %v442, %v447
      %v479 = vmul.f32 %v443, %v447
      %v480 = vadd.f32 %v380, %v448
      %v481 = vadd.f32 %v381, %v449
      %v482 = vadd.f32 %v382, %v450
      %v483 = vadd.f32 %v383, %v451
      %v484 = vadd.f32 %v384, %v452
      %v485 = vadd.f32 %v385, %v453
      %v486 = vadd.f32 %v386, %v454
      %v487 = vadd.f32 %v387, %v455
      %v488 = vadd.f32 %v388, %v456
      %v489 = vadd.f32 %v389, %v457
      %v490 = vadd.f32 %v390, %v458
      %v491 = vadd.f32 %v391, %v459
      %v492 = vadd.f32 %v392, %v460
      %v493 = vadd.f32 %v393, %v461
      %v494 = vadd.f32 %v394, %v462
      %v495 = vadd.f32 %v395, %v463
      %v496 = vadd.f32 %v396, %v464
      %v497 = vadd.f32 %v397, %v465
      %v498 = vadd.f32 %v398, %v466
      %v499 = vadd.f32 %v399, %v467
      %v500 = vadd.f32 %v400, %v468
      %v501 = vadd.f32 %v401, %v469
      %v502 = vadd.f32 %v402, %v470
      %v503 = vadd.f32 %v403, %v471
      %v504 = vadd.f32 %v404, %v472
      %v505 = vadd.f32 %v405, %v473
      %v506 = vadd.f32 %v406, %v474
      %v507 = vadd.f32 %v407, %v475
      %v508 = vadd.f32 %v408, %v476
      %v509 = vadd.f32 %v409, %v477
      %v510 = vadd.f32 %v410, %v478
      %v511 = vadd.f32 %v411, %v479
      %v512 = vld [vmem:[#allocation2 + $0x9] sm:$0xff]
      %v513 = vld [vmem:[#allocation2 + $0x11] sm:$0xff]
      %v514 = vld [vmem:[#allocation2 + $0x29] sm:$0xff]
      %v515 = vld [vmem:[#allocation2 + $0x31] sm:$0xff]
      %v516 = vld [vmem:[#allocation2 + $0x49] sm:$0xff]
      %v517 = vld [vmem:[#allocation2 + $0x51] sm:$0xff]
      %v518 = vld [vmem:[#allocation2 + $0x69] sm:$0xff]
      %v519 = vld [vmem:[#allocation2 + $0x71] sm:$0xff]
      %v520 = vld [vmem:[#allocation2 + $0x89] sm:$0xff]
      %v521 = vld [vmem:[#allocation2 + $0x91] sm:$0xff]
      %v522 = vld [vmem:[#allocation2 + $0xa9] sm:$0xff]
      %v523 = vld [vmem:[#allocation2 + $0xb1] sm:$0xff]
      %v524 = vld [vmem:[#allocation2 + $0xc9] sm:$0xff]
      %v525 = vld [vmem:[#allocation2 + $0xd1] sm:$0xff]
      %v526 = vld [vmem:[#allocation2 + $0xe9] sm:$0xff]
      %v527 = vld [vmem:[#allocation2 + $0xf1] sm:$0xff]
      %v528 = vld [vmem:[#allocation2 + $0x109] sm:$0xff]
      %v529 = vld [vmem:[#allocation2 + $0x111] sm:$0xff]
      %v530 = vld [vmem:[#allocation2 + $0x129] sm:$0xff]
      %v531 = vld [vmem:[#allocation2 + $0x131] sm:$0xff]
      %v532 = vld [vmem:[#allocation2 + $0x149] sm:$0xff]
      %v533 = vld [vmem:[#allocation2 + $0x151] sm:$0xff]
      %v534 = vld [vmem:[#allocation2 + $0x169] sm:$0xff]
      %v535 = vld [vmem:[#allocation2 + $0x171] sm:$0xff]
      %v536 = vld [vmem:[#allocation2 + $0x189] sm:$0xff]
      %v537 = vld [vmem:[#allocation2 + $0x191] sm:$0xff]
      %v538 = vld [vmem:[#allocation2 + $0x1a9] sm:$0xff]
      %v539 = vld [vmem:[#allocation2 + $0x1b1] sm:$0xff]
      %v540 = vld [vmem:[#allocation2 + $0x1c9] sm:$0xff]
      %v541 = vld [vmem:[#allocation2 + $0x1d1] sm:$0xff]
      %v542 = vld [vmem:[#allocation2 + $0x1e9] sm:$0xff]
      %v543 = vld [vmem:[#allocation2 + $0x1f1] sm:$0xff]
      %v544 = vlaneseq
      %v545 = vshrl.u32 %v544, 7
      %v546 = vsub.s32 2, %v545
      %v547 = vrot.slane %v309, %v546
      %v548 = vmul.f32 %v512, %v547
      %v549 = vmul.f32 %v513, %v547
      %v550 = vmul.f32 %v514, %v547
      %v551 = vmul.f32 %v515, %v547
      %v552 = vmul.f32 %v516, %v547
      %v553 = vmul.f32 %v517, %v547
      %v554 = vmul.f32 %v518, %v547
      %v555 = vmul.f32 %v519, %v547
      %v556 = vmul.f32 %v520, %v547
      %v557 = vmul.f32 %v521, %v547
      %v558 = vmul.f32 %v522, %v547
      %v559 = vmul.f32 %v523, %v547
      %v560 = vmul.f32 %v524, %v547
      %v561 = vmul.f32 %v525, %v547
      %v562 = vmul.f32 %v526, %v547
      %v563 = vmul.f32 %v527, %v547
      %v564 = vmul.f32 %v528, %v547
      %v565 = vmul.f32 %v529, %v547
      %v566 = vmul.f32 %v530, %v547
      %v567 = vmul.f32 %v531, %v547
      %v568 = vmul.f32 %v532, %v547
      %v569 = vmul.f32 %v533, %v547
      %v570 = vmul.f32 %v534, %v547
      %v571 = vmul.f32 %v535, %v547
      %v572 = vmul.f32 %v536, %v547
      %v573 = vmul.f32 %v537, %v547
      %v574 = vmul.f32 %v538, %v547
      %v575 = vmul.f32 %v539, %v547
      %v576 = vmul.f32 %v540, %v547
      %v577 = vmul.f32 %v541, %v547
      %v578 = vmul.f32 %v542, %v547
      %v579 = vmul.f32 %v543, %v547
      %v580 = vadd.f32 %v480, %v548
      %v581 = vadd.f32 %v481, %v549
      %v582 = vadd.f32 %v482, %v550
      %v583 = vadd.f32 %v483, %v551
      %v584 = vadd.f32 %v484, %v552
      %v585 = vadd.f32 %v485, %v553
      %v586 = vadd.f32 %v486, %v554
      %v587 = vadd.f32 %v487, %v555
      %v588 = vadd.f32 %v488, %v556
      %v589 = vadd.f32 %v489, %v557
      %v590 = vadd.f32 %v490, %v558
      %v591 = vadd.f32 %v491, %v559
      %v592 = vadd.f32 %v492, %v560
      %v593 = vadd.f32 %v493, %v561
      %v594 = vadd.f32 %v494, %v562
      %v595 = vadd.f32 %v495, %v563
      %v596 = vadd.f32 %v496, %v564
      %v597 = vadd.f32 %v497, %v565
      %v598 = vadd.f32 %v498, %v566
      %v599 = vadd.f32 %v499, %v567
      %v600 = vadd.f32 %v500, %v568
      %v601 = vadd.f32 %v501, %v569
      %v602 = vadd.f32 %v502, %v570
      %v603 = vadd.f32 %v503, %v571
      %v604 = vadd.f32 %v504, %v572
      %v605 = vadd.f32 %v505, %v573
      %v606 = vadd.f32 %v506, %v574
      %v607 = vadd.f32 %v507, %v575
      %v608 = vadd.f32 %v508, %v576
      %v609 = vadd.f32 %v509, %v577
      %v610 = vadd.f32 %v510, %v578
      %v611 = vadd.f32 %v511, %v579
      %v612 = vld [vmem:[%s276 + $0x7] sm:$0xff]
      %v613 = vld [vmem:[%s276 + $0xf] sm:$0xff]
      %v614 = vld [vmem:[%s276 + $0x27] sm:$0xff]
      %v615 = vld [vmem:[%s276 + $0x2f] sm:$0xff]
      %v616 = vld [vmem:[%s276 + $0x47] sm:$0xff]
      %v617 = vld [vmem:[%s276 + $0x4f] sm:$0xff]
      %v618 = vld [vmem:[%s276 + $0x67] sm:$0xff]
      %v619 = vld [vmem:[%s276 + $0x6f] sm:$0xff]
      %v620 = vld [vmem:[%s276 + $0x87] sm:$0xff]
      %v621 = vld [vmem:[%s276 + $0x8f] sm:$0xff]
      %v622 = vld [vmem:[%s276 + $0xa7] sm:$0xff]
      %v623 = vld [vmem:[%s276 + $0xaf] sm:$0xff]
      %v624 = vld [vmem:[%s276 + $0xc7] sm:$0xff]
      %v625 = vld [vmem:[%s276 + $0xcf] sm:$0xff]
      %v626 = vld [vmem:[%s276 + $0xe7] sm:$0xff]
      %v627 = vld [vmem:[%s276 + $0xef] sm:$0xff]
      %v628 = vld [vmem:[%s276 + $0x107] sm:$0xff]
      %v629 = vld [vmem:[%s276 + $0x10f] sm:$0xff]
      %v630 = vld [vmem:[%s276 + $0x127] sm:$0xff]
      %v631 = vld [vmem:[%s276 + $0x12f] sm:$0xff]
      %v632 = vld [vmem:[%s276 + $0x147] sm:$0xff]
      %v633 = vld [vmem:[%s276 + $0x14f] sm:$0xff]
      %v634 = vld [vmem:[%s276 + $0x167] sm:$0xff]
      %v635 = vld [vmem:[%s276 + $0x16f] sm:$0xff]
      %v636 = vld [vmem:[%s276 + $0x187] sm:$0xff]
      %v637 = vld [vmem:[%s276 + $0x18f] sm:$0xff]
      %v638 = vld [vmem:[%s276 + $0x1a7] sm:$0xff]
      %v639 = vld [vmem:[%s276 + $0x1af] sm:$0xff]
      %v640 = vld [vmem:[%s276 + $0x1c7] sm:$0xff]
      %v641 = vld [vmem:[%s276 + $0x1cf] sm:$0xff]
      %v642 = vld [vmem:[%s276 + $0x1e7] sm:$0xff]
      %v643 = vld [vmem:[%s276 + $0x1ef] sm:$0xff]
      %v644 = vlaneseq
      %v645 = vshrl.u32 %v644, 7
      %v646 = vsub.s32 0, %v645
      %v647 = vrot.slane %v310, %v646
      %v648 = vmul.f32 %v612, %v647
      %v649 = vmul.f32 %v613, %v647
      %v650 = vmul.f32 %v614, %v647
      %v651 = vmul.f32 %v615, %v647
      %v652 = vmul.f32 %v616, %v647
      %v653 = vmul.f32 %v617, %v647
      %v654 = vmul.f32 %v618, %v647
      %v655 = vmul.f32 %v619, %v647
      %v656 = vmul.f32 %v620, %v647
      %v657 = vmul.f32 %v621, %v647
      %v658 = vmul.f32 %v622, %v647
      %v659 = vmul.f32 %v623, %v647
      %v660 = vmul.f32 %v624, %v647
      %v661 = vmul.f32 %v625, %v647
      %v662 = vmul.f32 %v626, %v647
      %v663 = vmul.f32 %v627, %v647
      %v664 = vmul.f32 %v628, %v647
      %v665 = vmul.f32 %v629, %v647
      %v666 = vmul.f32 %v630, %v647
      %v667 = vmul.f32 %v631, %v647
      %v668 = vmul.f32 %v632, %v647
      %v669 = vmul.f32 %v633, %v647
      %v670 = vmul.f32 %v634, %v647
      %v671 = vmul.f32 %v635, %v647
      %v672 = vmul.f32 %v636, %v647
      %v673 = vmul.f32 %v637, %v647
      %v674 = vmul.f32 %v638, %v647
      %v675 = vmul.f32 %v639, %v647
      %v676 = vmul.f32 %v640, %v647
      %v677 = vmul.f32 %v641, %v647
      %v678 = vmul.f32 %v642, %v647
      %v679 = vmul.f32 %v643, %v647
      %v680 = vadd.f32 %v580, %v648
      %v681 = vadd.f32 %v581, %v649
      %v682 = vadd.f32 %v582, %v650
      %v683 = vadd.f32 %v583, %v651
      %v684 = vadd.f32 %v584, %v652
      %v685 = vadd.f32 %v585, %v653
      %v686 = vadd.f32 %v586, %v654
      %v687 = vadd.f32 %v587, %v655
      %v688 = vadd.f32 %v588, %v656
      %v689 = vadd.f32 %v589, %v657
      %v690 = vadd.f32 %v590, %v658
      %v691 = vadd.f32 %v591, %v659
      %v692 = vadd.f32 %v592, %v660
      %v693 = vadd.f32 %v593, %v661
      %v694 = vadd.f32 %v594, %v662
      %v695 = vadd.f32 %v595, %v663
      %v696 = vadd.f32 %v596, %v664
      %v697 = vadd.f32 %v597, %v665
      %v698 = vadd.f32 %v598, %v666
      %v699 = vadd.f32 %v599, %v667
      %v700 = vadd.f32 %v600, %v668
      %v701 = vadd.f32 %v601, %v669
      %v702 = vadd.f32 %v602, %v670
      %v703 = vadd.f32 %v603, %v671
      %v704 = vadd.f32 %v604, %v672
      %v705 = vadd.f32 %v605, %v673
      %v706 = vadd.f32 %v606, %v674
      %v707 = vadd.f32 %v607, %v675
      %v708 = vadd.f32 %v608, %v676
      %v709 = vadd.f32 %v609, %v677
      %v710 = vadd.f32 %v610, %v678
      %v711 = vadd.f32 %v611, %v679
      %v712 = vld [vmem:[%s276 + $0x8] sm:$0xff]
      %v713 = vld [vmem:[%s276 + $0x10] sm:$0xff]
      %v714 = vld [vmem:[%s276 + $0x28] sm:$0xff]
      %v715 = vld [vmem:[%s276 + $0x30] sm:$0xff]
      %v716 = vld [vmem:[%s276 + $0x48] sm:$0xff]
      %v717 = vld [vmem:[%s276 + $0x50] sm:$0xff]
      %v718 = vld [vmem:[%s276 + $0x68] sm:$0xff]
      %v719 = vld [vmem:[%s276 + $0x70] sm:$0xff]
      %v720 = vld [vmem:[%s276 + $0x88] sm:$0xff]
      %v721 = vld [vmem:[%s276 + $0x90] sm:$0xff]
      %v722 = vld [vmem:[%s276 + $0xa8] sm:$0xff]
      %v723 = vld [vmem:[%s276 + $0xb0] sm:$0xff]
      %v724 = vld [vmem:[%s276 + $0xc8] sm:$0xff]
      %v725 = vld [vmem:[%s276 + $0xd0] sm:$0xff]
      %v726 = vld [vmem:[%s276 + $0xe8] sm:$0xff]
      %v727 = vld [vmem:[%s276 + $0xf0] sm:$0xff]
      %v728 = vld [vmem:[%s276 + $0x108] sm:$0xff]
      %v729 = vld [vmem:[%s276 + $0x110] sm:$0xff]
      %v730 = vld [vmem:[%s276 + $0x128] sm:$0xff]
      %v731 = vld [vmem:[%s276 + $0x130] sm:$0xff]
      %v732 = vld [vmem:[%s276 + $0x148] sm:$0xff]
      %v733 = vld [vmem:[%s276 + $0x150] sm:$0xff]
      %v734 = vld [vmem:[%s276 + $0x168] sm:$0xff]
      %v735 = vld [vmem:[%s276 + $0x170] sm:$0xff]
      %v736 = vld [vmem:[%s276 + $0x188] sm:$0xff]
      %v737 = vld [vmem:[%s276 + $0x190] sm:$0xff]
      %v738 = vld [vmem:[%s276 + $0x1a8] sm:$0xff]
      %v739 = vld [vmem:[%s276 + $0x1b0] sm:$0xff]
      %v740 = vld [vmem:[%s276 + $0x1c8] sm:$0xff]
      %v741 = vld [vmem:[%s276 + $0x1d0] sm:$0xff]
      %v742 = vld [vmem:[%s276 + $0x1e8] sm:$0xff]
      %v743 = vld [vmem:[%s276 + $0x1f0] sm:$0xff]
      %v744 = vlaneseq
      %v745 = vshrl.u32 %v744, 7
      %v746 = vsub.s32 1, %v745
      %v747 = vrot.slane %v310, %v746
      %v748 = vmul.f32 %v712, %v747
      %v749 = vmul.f32 %v713, %v747
      %v750 = vmul.f32 %v714, %v747
      %v751 = vmul.f32 %v715, %v747
      %v752 = vmul.f32 %v716, %v747
      %v753 = vmul.f32 %v717, %v747
      %v754 = vmul.f32 %v718, %v747
      %v755 = vmul.f32 %v719, %v747
      %v756 = vmul.f32 %v720, %v747
      %v757 = vmul.f32 %v721, %v747
      %v758 = vmul.f32 %v722, %v747
      %v759 = vmul.f32 %v723, %v747
      %v760 = vmul.f32 %v724, %v747
      %v761 = vmul.f32 %v725, %v747
      %v762 = vmul.f32 %v726, %v747
      %v763 = vmul.f32 %v727, %v747
      %v764 = vmul.f32 %v728, %v747
      %v765 = vmul.f32 %v729, %v747
      %v766 = vmul.f32 %v730, %v747
      %v767 = vmul.f32 %v731, %v747
      %v768 = vmul.f32 %v732, %v747
      %v769 = vmul.f32 %v733, %v747
      %v770 = vmul.f32 %v734, %v747
      %v771 = vmul.f32 %v735, %v747
      %v772 = vmul.f32 %v736, %v747
      %v773 = vmul.f32 %v737, %v747
      %v774 = vmul.f32 %v738, %v747
      %v775 = vmul.f32 %v739, %v747
      %v776 = vmul.f32 %v740, %v747
      %v777 = vmul.f32 %v741, %v747
      %v778 = vmul.f32 %v742, %v747
      %v779 = vmul.f32 %v743, %v747
      %v780 = vadd.f32 %v680, %v748
      %v781 = vadd.f32 %v681, %v749
      %v782 = vadd.f32 %v682, %v750
      %v783 = vadd.f32 %v683, %v751
      %v784 = vadd.f32 %v684, %v752
      %v785 = vadd.f32 %v685, %v753
      %v786 = vadd.f32 %v686, %v754
      %v787 = vadd.f32 %v687, %v755
      %v788 = vadd.f32 %v688, %v756
      %v789 = vadd.f32 %v689, %v757
      %v790 = vadd.f32 %v690, %v758
      %v791 = vadd.f32 %v691, %v759
      %v792 = vadd.f32 %v692, %v760
      %v793 = vadd.f32 %v693, %v761
      %v794 = vadd.f32 %v694, %v762
      %v795 = vadd.f32 %v695, %v763
      %v796 = vadd.f32 %v696, %v764
      %v797 = vadd.f32 %v697, %v765
      %v798 = vadd.f32 %v698, %v766
      %v799 = vadd.f32 %v699, %v767
      %v800 = vadd.f32 %v700, %v768
      %v801 = vadd.f32 %v701, %v769
      %v802 = vadd.f32 %v702, %v770
      %v803 = vadd.f32 %v703, %v771
      %v804 = vadd.f32 %v704, %v772
      %v805 = vadd.f32 %v705, %v773
      %v806 = vadd.f32 %v706, %v774
      %v807 = vadd.f32 %v707, %v775
      %v808 = vadd.f32 %v708, %v776
      %v809 = vadd.f32 %v709, %v777
      %v810 = vadd.f32 %v710, %v778
      %v811 = vadd.f32 %v711, %v779
      %v812 = vld [vmem:[%s276 + $0x9] sm:$0xff]
      %v813 = vld [vmem:[%s276 + $0x11] sm:$0xff]
      %v814 = vld [vmem:[%s276 + $0x29] sm:$0xff]
      %v815 = vld [vmem:[%s276 + $0x31] sm:$0xff]
      %v816 = vld [vmem:[%s276 + $0x49] sm:$0xff]
      %v817 = vld [vmem:[%s276 + $0x51] sm:$0xff]
      %v818 = vld [vmem:[%s276 + $0x69] sm:$0xff]
      %v819 = vld [vmem:[%s276 + $0x71] sm:$0xff]
      %v820 = vld [vmem:[%s276 + $0x89] sm:$0xff]
      %v821 = vld [vmem:[%s276 + $0x91] sm:$0xff]
      %v822 = vld [vmem:[%s276 + $0xa9] sm:$0xff]
      %v823 = vld [vmem:[%s276 + $0xb1] sm:$0xff]
      %v824 = vld [vmem:[%s276 + $0xc9] sm:$0xff]
      %v825 = vld [vmem:[%s276 + $0xd1] sm:$0xff]
      %v826 = vld [vmem:[%s276 + $0xe9] sm:$0xff]
      %v827 = vld [vmem:[%s276 + $0xf1] sm:$0xff]
      %v828 = vld [vmem:[%s276 + $0x109] sm:$0xff]
      %v829 = vld [vmem:[%s276 + $0x111] sm:$0xff]
      %v830 = vld [vmem:[%s276 + $0x129] sm:$0xff]
      %v831 = vld [vmem:[%s276 + $0x131] sm:$0xff]
      %v832 = vld [vmem:[%s276 + $0x149] sm:$0xff]
      %v833 = vld [vmem:[%s276 + $0x151] sm:$0xff]
      %v834 = vld [vmem:[%s276 + $0x169] sm:$0xff]
      %v835 = vld [vmem:[%s276 + $0x171] sm:$0xff]
      %v836 = vld [vmem:[%s276 + $0x189] sm:$0xff]
      %v837 = vld [vmem:[%s276 + $0x191] sm:$0xff]
      %v838 = vld [vmem:[%s276 + $0x1a9] sm:$0xff]
      %v839 = vld [vmem:[%s276 + $0x1b1] sm:$0xff]
      %v840 = vld [vmem:[%s276 + $0x1c9] sm:$0xff]
      %v841 = vld [vmem:[%s276 + $0x1d1] sm:$0xff]
      %v842 = vld [vmem:[%s276 + $0x1e9] sm:$0xff]
      %v843 = vld [vmem:[%s276 + $0x1f1] sm:$0xff]
      %v844 = vlaneseq
      %v845 = vshrl.u32 %v844, 7
      %v846 = vsub.s32 2, %v845
      %v847 = vrot.slane %v310, %v846
      %v848 = vmul.f32 %v812, %v847
      %v849 = vmul.f32 %v813, %v847
      %v850 = vmul.f32 %v814, %v847
      %v851 = vmul.f32 %v815, %v847
      %v852 = vmul.f32 %v816, %v847
      %v853 = vmul.f32 %v817, %v847
      %v854 = vmul.f32 %v818, %v847
      %v855 = vmul.f32 %v819, %v847
      %v856 = vmul.f32 %v820, %v847
      %v857 = vmul.f32 %v821, %v847
      %v858 = vmul.f32 %v822, %v847
      %v859 = vmul.f32 %v823, %v847
      %v860 = vmul.f32 %v824, %v847
      %v861 = vmul.f32 %v825, %v847
      %v862 = vmul.f32 %v826, %v847
      %v863 = vmul.f32 %v827, %v847
      %v864 = vmul.f32 %v828, %v847
      %v865 = vmul.f32 %v829, %v847
      %v866 = vmul.f32 %v830, %v847
      %v867 = vmul.f32 %v831, %v847
      %v868 = vmul.f32 %v832, %v847
      %v869 = vmul.f32 %v833, %v847
      %v870 = vmul.f32 %v834, %v847
      %v871 = vmul.f32 %v835, %v847
      %v872 = vmul.f32 %v836, %v847
      %v873 = vmul.f32 %v837, %v847
      %v874 = vmul.f32 %v838, %v847
      %v875 = vmul.f32 %v839, %v847
      %v876 = vmul.f32 %v840, %v847
      %v877 = vmul.f32 %v841, %v847
      %v878 = vmul.f32 %v842, %v847
      %v879 = vmul.f32 %v843, %v847
      %v880 = vadd.f32 %v780, %v848
      %v881 = vadd.f32 %v781, %v849
      %v882 = vadd.f32 %v782, %v850
      %v883 = vadd.f32 %v783, %v851
      %v884 = vadd.f32 %v784, %v852
      %v885 = vadd.f32 %v785, %v853
      %v886 = vadd.f32 %v786, %v854
      %v887 = vadd.f32 %v787, %v855
      %v888 = vadd.f32 %v788, %v856
      %v889 = vadd.f32 %v789, %v857
      %v890 = vadd.f32 %v790, %v858
      %v891 = vadd.f32 %v791, %v859
      %v892 = vadd.f32 %v792, %v860
      %v893 = vadd.f32 %v793, %v861
      %v894 = vadd.f32 %v794, %v862
      %v895 = vadd.f32 %v795, %v863
      %v896 = vadd.f32 %v796, %v864
      %v897 = vadd.f32 %v797, %v865
      %v898 = vadd.f32 %v798, %v866
      %v899 = vadd.f32 %v799, %v867
      %v900 = vadd.f32 %v800, %v868
      %v901 = vadd.f32 %v801, %v869
      %v902 = vadd.f32 %v802, %v870
      %v903 = vadd.f32 %v803, %v871
      %v904 = vadd.f32 %v804, %v872
      %v905 = vadd.f32 %v805, %v873
      %v906 = vadd.f32 %v806, %v874
      %v907 = vadd.f32 %v807, %v875
      %v908 = vadd.f32 %v808, %v876
      %v909 = vadd.f32 %v809, %v877
      %v910 = vadd.f32 %v810, %v878
      %v911 = vadd.f32 %v811, %v879
      %s912 = scalar_lea.vmem [#allocation2], 64
      %v913 = vld [vmem:[%s912 + $0x7] sm:$0xff]
      %v914 = vld [vmem:[%s912 + $0xf] sm:$0xff]
      %v915 = vld [vmem:[%s912 + $0x27] sm:$0xff]
      %v916 = vld [vmem:[%s912 + $0x2f] sm:$0xff]
      %v917 = vld [vmem:[%s912 + $0x47] sm:$0xff]
      %v918 = vld [vmem:[%s912 + $0x4f] sm:$0xff]
      %v919 = vld [vmem:[%s912 + $0x67] sm:$0xff]
      %v920 = vld [vmem:[%s912 + $0x6f] sm:$0xff]
      %v921 = vld [vmem:[%s912 + $0x87] sm:$0xff]
      %v922 = vld [vmem:[%s912 + $0x8f] sm:$0xff]
      %v923 = vld [vmem:[%s912 + $0xa7] sm:$0xff]
      %v924 = vld [vmem:[%s912 + $0xaf] sm:$0xff]
      %v925 = vld [vmem:[%s912 + $0xc7] sm:$0xff]
      %v926 = vld [vmem:[%s912 + $0xcf] sm:$0xff]
      %v927 = vld [vmem:[%s912 + $0xe7] sm:$0xff]
      %v928 = vld [vmem:[%s912 + $0xef] sm:$0xff]
      %v929 = vld [vmem:[%s912 + $0x107] sm:$0xff]
      %v930 = vld [vmem:[%s912 + $0x10f] sm:$0xff]
      %v931 = vld [vmem:[%s912 + $0x127] sm:$0xff]
      %v932 = vld [vmem:[%s912 + $0x12f] sm:$0xff]
      %v933 = vld [vmem:[%s912 + $0x147] sm:$0xff]
      %v934 = vld [vmem:[%s912 + $0x14f] sm:$0xff]
      %v935 = vld [vmem:[%s912 + $0x167] sm:$0xff]
      %v936 = vld [vmem:[%s912 + $0x16f] sm:$0xff]
      %v937 = vld [vmem:[%s912 + $0x187] sm:$0xff]
      %v938 = vld [vmem:[%s912 + $0x18f] sm:$0xff]
      %v939 = vld [vmem:[%s912 + $0x1a7] sm:$0xff]
      %v940 = vld [vmem:[%s912 + $0x1af] sm:$0xff]
      %v941 = vld [vmem:[%s912 + $0x1c7] sm:$0xff]
      %v942 = vld [vmem:[%s912 + $0x1cf] sm:$0xff]
      %v943 = vld [vmem:[%s912 + $0x1e7] sm:$0xff]
      %v944 = vld [vmem:[%s912 + $0x1ef] sm:$0xff]
      %v945 = vlaneseq
      %v946 = vshrl.u32 %v945, 7
      %v947 = vsub.s32 0, %v946
      %v948 = vrot.slane %v311, %v947
      %v949 = vmul.f32 %v913, %v948
      %v950 = vmul.f32 %v914, %v948
      %v951 = vmul.f32 %v915, %v948
      %v952 = vmul.f32 %v916, %v948
      %v953 = vmul.f32 %v917, %v948
      %v954 = vmul.f32 %v918, %v948
      %v955 = vmul.f32 %v919, %v948
      %v956 = vmul.f32 %v920, %v948
      %v957 = vmul.f32 %v921, %v948
      %v958 = vmul.f32 %v922, %v948
      %v959 = vmul.f32 %v923, %v948
      %v960 = vmul.f32 %v924, %v948
      %v961 = vmul.f32 %v925, %v948
      %v962 = vmul.f32 %v926, %v948
      %v963 = vmul.f32 %v927, %v948
      %v964 = vmul.f32 %v928, %v948
      %v965 = vmul.f32 %v929, %v948
      %v966 = vmul.f32 %v930, %v948
      %v967 = vmul.f32 %v931, %v948
      %v968 = vmul.f32 %v932, %v948
      %v969 = vmul.f32 %v933, %v948
      %v970 = vmul.f32 %v934, %v948
      %v971 = vmul.f32 %v935, %v948
      %v972 = vmul.f32 %v936, %v948
      %v973 = vmul.f32 %v937, %v948
      %v974 = vmul.f32 %v938, %v948
      %v975 = vmul.f32 %v939, %v948
      %v976 = vmul.f32 %v940, %v948
      %v977 = vmul.f32 %v941, %v948
      %v978 = vmul.f32 %v942, %v948
      %v979 = vmul.f32 %v943, %v948
      %v980 = vmul.f32 %v944, %v948
      %v981 = vadd.f32 %v880, %v949
      %v982 = vadd.f32 %v881, %v950
      %v983 = vadd.f32 %v882, %v951
      %v984 = vadd.f32 %v883, %v952
      %v985 = vadd.f32 %v884, %v953
      %v986 = vadd.f32 %v885, %v954
      %v987 = vadd.f32 %v886, %v955
      %v988 = vadd.f32 %v887, %v956
      %v989 = vadd.f32 %v888, %v957
      %v990 = vadd.f32 %v889, %v958
      %v991 = vadd.f32 %v890, %v959
      %v992 = vadd.f32 %v891, %v960
      %v993 = vadd.f32 %v892, %v961
      %v994 = vadd.f32 %v893, %v962
      %v995 = vadd.f32 %v894, %v963
      %v996 = vadd.f32 %v895, %v964
      %v997 = vadd.f32 %v896, %v965
      %v998 = vadd.f32 %v897, %v966
      %v999 = vadd.f32 %v898, %v967
      %v1000 = vadd.f32 %v899, %v968
      %v1001 = vadd.f32 %v900, %v969
      %v1002 = vadd.f32 %v901, %v970
      %v1003 = vadd.f32 %v902, %v971
      %v1004 = vadd.f32 %v903, %v972
      %v1005 = vadd.f32 %v904, %v973
      %v1006 = vadd.f32 %v905, %v974
      %v1007 = vadd.f32 %v906, %v975
      %v1008 = vadd.f32 %v907, %v976
      %v1009 = vadd.f32 %v908, %v977
      %v1010 = vadd.f32 %v909, %v978
      %v1011 = vadd.f32 %v910, %v979
      %v1012 = vadd.f32 %v911, %v980
      %v1013 = vld [vmem:[%s912 + $0x8] sm:$0xff]
      %v1014 = vld [vmem:[%s912 + $0x10] sm:$0xff]
      %v1015 = vld [vmem:[%s912 + $0x28] sm:$0xff]
      %v1016 = vld [vmem:[%s912 + $0x30] sm:$0xff]
      %v1017 = vld [vmem:[%s912 + $0x48] sm:$0xff]
      %v1018 = vld [vmem:[%s912 + $0x50] sm:$0xff]
      %v1019 = vld [vmem:[%s912 + $0x68] sm:$0xff]
      %v1020 = vld [vmem:[%s912 + $0x70] sm:$0xff]
      %v1021 = vld [vmem:[%s912 + $0x88] sm:$0xff]
      %v1022 = vld [vmem:[%s912 + $0x90] sm:$0xff]
      %v1023 = vld [vmem:[%s912 + $0xa8] sm:$0xff]
      %v1024 = vld [vmem:[%s912 + $0xb0] sm:$0xff]
      %v1025 = vld [vmem:[%s912 + $0xc8] sm:$0xff]
      %v1026 = vld [vmem:[%s912 + $0xd0] sm:$0xff]
      %v1027 = vld [vmem:[%s912 + $0xe8] sm:$0xff]
      %v1028 = vld [vmem:[%s912 + $0xf0] sm:$0xff]
      %v1029 = vld [vmem:[%s912 + $0x108] sm:$0xff]
      %v1030 = vld [vmem:[%s912 + $0x110] sm:$0xff]
      %v1031 = vld [vmem:[%s912 + $0x128] sm:$0xff]
      %v1032 = vld [vmem:[%s912 + $0x130] sm:$0xff]
      %v1033 = vld [vmem:[%s912 + $0x148] sm:$0xff]
      %v1034 = vld [vmem:[%s912 + $0x150] sm:$0xff]
      %v1035 = vld [vmem:[%s912 + $0x168] sm:$0xff]
      %v1036 = vld [vmem:[%s912 + $0x170] sm:$0xff]
      %v1037 = vld [vmem:[%s912 + $0x188] sm:$0xff]
      %v1038 = vld [vmem:[%s912 + $0x190] sm:$0xff]
      %v1039 = vld [vmem:[%s912 + $0x1a8] sm:$0xff]
      %v1040 = vld [vmem:[%s912 + $0x1b0] sm:$0xff]
      %v1041 = vld [vmem:[%s912 + $0x1c8] sm:$0xff]
      %v1042 = vld [vmem:[%s912 + $0x1d0] sm:$0xff]
      %v1043 = vld [vmem:[%s912 + $0x1e8] sm:$0xff]
      %v1044 = vld [vmem:[%s912 + $0x1f0] sm:$0xff]
      %v1045 = vlaneseq
      %v1046 = vshrl.u32 %v1045, 7
      %v1047 = vsub.s32 1, %v1046
      %v1048 = vrot.slane %v311, %v1047
      %v1049 = vmul.f32 %v1013, %v1048
      %v1050 = vmul.f32 %v1014, %v1048
      %v1051 = vmul.f32 %v1015, %v1048
      %v1052 = vmul.f32 %v1016, %v1048
      %v1053 = vmul.f32 %v1017, %v1048
      %v1054 = vmul.f32 %v1018, %v1048
      %v1055 = vmul.f32 %v1019, %v1048
      %v1056 = vmul.f32 %v1020, %v1048
      %v1057 = vmul.f32 %v1021, %v1048
      %v1058 = vmul.f32 %v1022, %v1048
      %v1059 = vmul.f32 %v1023, %v1048
      %v1060 = vmul.f32 %v1024, %v1048
      %v1061 = vmul.f32 %v1025, %v1048
      %v1062 = vmul.f32 %v1026, %v1048
      %v1063 = vmul.f32 %v1027, %v1048
      %v1064 = vmul.f32 %v1028, %v1048
      %v1065 = vmul.f32 %v1029, %v1048
      %v1066 = vmul.f32 %v1030, %v1048
      %v1067 = vmul.f32 %v1031, %v1048
      %v1068 = vmul.f32 %v1032, %v1048
      %v1069 = vmul.f32 %v1033, %v1048
      %v1070 = vmul.f32 %v1034, %v1048
      %v1071 = vmul.f32 %v1035, %v1048
      %v1072 = vmul.f32 %v1036, %v1048
      %v1073 = vmul.f32 %v1037, %v1048
      %v1074 = vmul.f32 %v1038, %v1048
      %v1075 = vmul.f32 %v1039, %v1048
      %v1076 = vmul.f32 %v1040, %v1048
      %v1077 = vmul.f32 %v1041, %v1048
      %v1078 = vmul.f32 %v1042, %v1048
      %v1079 = vmul.f32 %v1043, %v1048
      %v1080 = vmul.f32 %v1044, %v1048
      %v1081 = vadd.f32 %v981, %v1049
      %v1082 = vadd.f32 %v982, %v1050
      %v1083 = vadd.f32 %v983, %v1051
      %v1084 = vadd.f32 %v984, %v1052
      %v1085 = vadd.f32 %v985, %v1053
      %v1086 = vadd.f32 %v986, %v1054
      %v1087 = vadd.f32 %v987, %v1055
      %v1088 = vadd.f32 %v988, %v1056
      %v1089 = vadd.f32 %v989, %v1057
      %v1090 = vadd.f32 %v990, %v1058
      %v1091 = vadd.f32 %v991, %v1059
      %v1092 = vadd.f32 %v992, %v1060
      %v1093 = vadd.f32 %v993, %v1061
      %v1094 = vadd.f32 %v994, %v1062
      %v1095 = vadd.f32 %v995, %v1063
      %v1096 = vadd.f32 %v996, %v1064
      %v1097 = vadd.f32 %v997, %v1065
      %v1098 = vadd.f32 %v998, %v1066
      %v1099 = vadd.f32 %v999, %v1067
      %v1100 = vadd.f32 %v1000, %v1068
      %v1101 = vadd.f32 %v1001, %v1069
      %v1102 = vadd.f32 %v1002, %v1070
      %v1103 = vadd.f32 %v1003, %v1071
      %v1104 = vadd.f32 %v1004, %v1072
      %v1105 = vadd.f32 %v1005, %v1073
      %v1106 = vadd.f32 %v1006, %v1074
      %v1107 = vadd.f32 %v1007, %v1075
      %v1108 = vadd.f32 %v1008, %v1076
      %v1109 = vadd.f32 %v1009, %v1077
      %v1110 = vadd.f32 %v1010, %v1078
      %v1111 = vadd.f32 %v1011, %v1079
      %v1112 = vadd.f32 %v1012, %v1080
      %v1113 = vld [vmem:[%s912 + $0x9] sm:$0xff]
      %v1114 = vld [vmem:[%s912 + $0x11] sm:$0xff]
      %v1115 = vld [vmem:[%s912 + $0x29] sm:$0xff]
      %v1116 = vld [vmem:[%s912 + $0x31] sm:$0xff]
      %v1117 = vld [vmem:[%s912 + $0x49] sm:$0xff]
      %v1118 = vld [vmem:[%s912 + $0x51] sm:$0xff]
      %v1119 = vld [vmem:[%s912 + $0x69] sm:$0xff]
      %v1120 = vld [vmem:[%s912 + $0x71] sm:$0xff]
      %v1121 = vld [vmem:[%s912 + $0x89] sm:$0xff]
      %v1122 = vld [vmem:[%s912 + $0x91] sm:$0xff]
      %v1123 = vld [vmem:[%s912 + $0xa9] sm:$0xff]
      %v1124 = vld [vmem:[%s912 + $0xb1] sm:$0xff]
      %v1125 = vld [vmem:[%s912 + $0xc9] sm:$0xff]
      %v1126 = vld [vmem:[%s912 + $0xd1] sm:$0xff]
      %v1127 = vld [vmem:[%s912 + $0xe9] sm:$0xff]
      %v1128 = vld [vmem:[%s912 + $0xf1] sm:$0xff]
      %v1129 = vld [vmem:[%s912 + $0x109] sm:$0xff]
      %v1130 = vld [vmem:[%s912 + $0x111] sm:$0xff]
      %v1131 = vld [vmem:[%s912 + $0x129] sm:$0xff]
      %v1132 = vld [vmem:[%s912 + $0x131] sm:$0xff]
      %v1133 = vld [vmem:[%s912 + $0x149] sm:$0xff]
      %v1134 = vld [vmem:[%s912 + $0x151] sm:$0xff]
      %v1135 = vld [vmem:[%s912 + $0x169] sm:$0xff]
      %v1136 = vld [vmem:[%s912 + $0x171] sm:$0xff]
      %v1137 = vld [vmem:[%s912 + $0x189] sm:$0xff]
      %v1138 = vld [vmem:[%s912 + $0x191] sm:$0xff]
      %v1139 = vld [vmem:[%s912 + $0x1a9] sm:$0xff]
      %v1140 = vld [vmem:[%s912 + $0x1b1] sm:$0xff]
      %v1141 = vld [vmem:[%s912 + $0x1c9] sm:$0xff]
      %v1142 = vld [vmem:[%s912 + $0x1d1] sm:$0xff]
      %v1143 = vld [vmem:[%s912 + $0x1e9] sm:$0xff]
      %v1144 = vld [vmem:[%s912 + $0x1f1] sm:$0xff]
      %v1145 = vlaneseq
      %v1146 = vshrl.u32 %v1145, 7
      %v1147 = vsub.s32 2, %v1146
      %v1148 = vrot.slane %v311, %v1147
      %v1149 = vmul.f32 %v1113, %v1148
      %v1150 = vmul.f32 %v1114, %v1148
      %v1151 = vmul.f32 %v1115, %v1148
      %v1152 = vmul.f32 %v1116, %v1148
      %v1153 = vmul.f32 %v1117, %v1148
      %v1154 = vmul.f32 %v1118, %v1148
      %v1155 = vmul.f32 %v1119, %v1148
      %v1156 = vmul.f32 %v1120, %v1148
      %v1157 = vmul.f32 %v1121, %v1148
      %v1158 = vmul.f32 %v1122, %v1148
      %v1159 = vmul.f32 %v1123, %v1148
      %v1160 = vmul.f32 %v1124, %v1148
      %v1161 = vmul.f32 %v1125, %v1148
      %v1162 = vmul.f32 %v1126, %v1148
      %v1163 = vmul.f32 %v1127, %v1148
      %v1164 = vmul.f32 %v1128, %v1148
      %v1165 = vmul.f32 %v1129, %v1148
      %v1166 = vmul.f32 %v1130, %v1148
      %v1167 = vmul.f32 %v1131, %v1148
      %v1168 = vmul.f32 %v1132, %v1148
      %v1169 = vmul.f32 %v1133, %v1148
      %v1170 = vmul.f32 %v1134, %v1148
      %v1171 = vmul.f32 %v1135, %v1148
      %v1172 = vmul.f32 %v1136, %v1148
      %v1173 = vmul.f32 %v1137, %v1148
      %v1174 = vmul.f32 %v1138, %v1148
      %v1175 = vmul.f32 %v1139, %v1148
      %v1176 = vmul.f32 %v1140, %v1148
      %v1177 = vmul.f32 %v1141, %v1148
      %v1178 = vmul.f32 %v1142, %v1148
      %v1179 = vmul.f32 %v1143, %v1148
      %v1180 = vmul.f32 %v1144, %v1148
      %v1181 = vadd.f32 %v1081, %v1149
      %v1182 = vadd.f32 %v1082, %v1150
      %v1183 = vadd.f32 %v1083, %v1151
      %v1184 = vadd.f32 %v1084, %v1152
      %v1185 = vadd.f32 %v1085, %v1153
      %v1186 = vadd.f32 %v1086, %v1154
      %v1187 = vadd.f32 %v1087, %v1155
      %v1188 = vadd.f32 %v1088, %v1156
      %v1189 = vadd.f32 %v1089, %v1157
      %v1190 = vadd.f32 %v1090, %v1158
      %v1191 = vadd.f32 %v1091, %v1159
      %v1192 = vadd.f32 %v1092, %v1160
      %v1193 = vadd.f32 %v1093, %v1161
      %v1194 = vadd.f32 %v1094, %v1162
      %v1195 = vadd.f32 %v1095, %v1163
      %v1196 = vadd.f32 %v1096, %v1164
      %v1197 = vadd.f32 %v1097, %v1165
      %v1198 = vadd.f32 %v1098, %v1166
      %v1199 = vadd.f32 %v1099, %v1167
      %v1200 = vadd.f32 %v1100, %v1168
      %v1201 = vadd.f32 %v1101, %v1169
      %v1202 = vadd.f32 %v1102, %v1170
      %v1203 = vadd.f32 %v1103, %v1171
      %v1204 = vadd.f32 %v1104, %v1172
      %v1205 = vadd.f32 %v1105, %v1173
      %v1206 = vadd.f32 %v1106, %v1174
      %v1207 = vadd.f32 %v1107, %v1175
      %v1208 = vadd.f32 %v1108, %v1176
      %v1209 = vadd.f32 %v1109, %v1177
      %v1210 = vadd.f32 %v1110, %v1178
      %v1211 = vadd.f32 %v1111, %v1179
      %v1212 = vadd.f32 %v1112, %v1180
      %v1213 = vld [vmem:[%s2] sm:$0xf]
      %v1215 = vsel %vm171, %v1181, 0
      %v1218 = vsel %vm171, %v1182, 0
      %v1221 = vsel %vm171, %v1183, 0
      %v1224 = vsel %vm171, %v1184, 0
      %v1227 = vsel %vm171, %v1185, 0
      %v1230 = vsel %vm171, %v1186, 0
      %v1233 = vsel %vm171, %v1187, 0
      %v1236 = vsel %vm171, %v1188, 0
      %v1239 = vsel %vm171, %v1189, 0
      %v1242 = vsel %vm171, %v1190, 0
      %v1245 = vsel %vm171, %v1191, 0
      %v1248 = vsel %vm171, %v1192, 0
      %v1251 = vsel %vm171, %v1193, 0
      %v1254 = vsel %vm171, %v1194, 0
      %v1257 = vsel %vm171, %v1195, 0
      %v1260 = vsel %vm171, %v1196, 0
      %v1263 = vsel %vm171, %v1197, 0
      %v1266 = vsel %vm171, %v1198, 0
      %v1269 = vsel %vm171, %v1199, 0
      %v1272 = vsel %vm171, %v1200, 0
      %v1275 = vsel %vm171, %v1201, 0
      %v1278 = vsel %vm171, %v1202, 0
      %v1281 = vsel %vm171, %v1203, 0
      %v1284 = vsel %vm171, %v1204, 0
      %v1287 = vsel %vm171, %v1205, 0
      %v1290 = vsel %vm171, %v1206, 0
      %v1293 = vsel %vm171, %v1207, 0
      %v1296 = vsel %vm171, %v1208, 0
      %v1299 = vsel %vm171, %v1209, 0
      %v1302 = vsel %vm171, %v1210, 0
      %v1305 = vsel %vm171, %v1211, 0
      %v1308 = vsel %vm171, %v1212, 0
      %vm1310 = vcmask 1043456
      %v1312 = vsel %vm1310, %v1213, 0
      %1314 = vmatprep.subr.mxu0 0.0
      %1315 = vmatpush1.msra.mxu0 %v1312
      %1316 = vmatprep.subr.mxu0 0.0
      %1317 = vmatpush1.msra.mxu0 0.0
      %1318 = vmatprep.subr.mxu0 0.0
      %1319 = vmatpush1.msra.mxu0 0.0
      %1320 = vmatprep.subr.mxu0 0.0
      %1321 = vmatpush1.msra.mxu0 0.0
      %1322 = vmatprep.subr.mxu0 0.0
      %1323 = vmatpush1.msra.mxu0 0.0
      %1324 = vmatprep.subr.mxu0 0.0
      %1325 = vmatpush1.msra.mxu0 0.0
      %1326 = vmatprep.subr.mxu0 0.0
      %1327 = vmatpush1.msra.mxu0 0.0
      %1328 = vmatprep.subr.mxu0 0.0
      %1329 = vmatpush1.msra.mxu0 0.0
      %1330 = vmatprep.subr.mxu0 0.0
      %1331 = vmatpush1.msra.mxu0 0.0
      %1332 = vmatprep.subr.mxu0 0.0
      %1333 = vmatpush1.msra.mxu0 0.0
      %1334 = vmatprep.subr.mxu0 0.0
      %1335 = vmatpush1.msra.mxu0 0.0
      %1336 = vmatprep.subr.mxu0 0.0
      %1337 = vmatpush1.msra.mxu0 0.0
      %1338 = vmatprep.subr.mxu0 0.0
      %1339 = vmatpush1.msra.mxu0 0.0
      %1340 = vmatprep.subr.mxu0 0.0
      %1341 = vmatpush1.msra.mxu0 0.0
      %1342 = vmatprep.subr.mxu0 0.0
      %1343 = vmatpush1.msra.mxu0 0.0
      %1344 = vmatprep.subr.mxu0 0.0
      %1345 = vmatpush1.msra.mxu0 0.0
      %1346 = vmatprep.subr.mxu0 0.0
      %1347 = vmatpush1.msra.mxu0 0.0
      %1348 = vmatprep.subr.mxu0 0.0
      %1349 = vmatpush1.msra.mxu0 0.0
      %1350 = vmatprep.subr.mxu0 0.0
      %1351 = vmatpush1.msra.mxu0 0.0
      %1352 = vmatprep.subr.mxu0 0.0
      %1353 = vmatpush1.msra.mxu0 0.0
      %1354 = vmatprep.subr.mxu0 0.0
      %1355 = vmatpush1.msra.mxu0 0.0
      %1356 = vmatprep.subr.mxu0 0.0
      %1357 = vmatpush1.msra.mxu0 0.0
      %1358 = vmatprep.subr.mxu0 0.0
      %1359 = vmatpush1.msra.mxu0 0.0
      %1360 = vmatprep.subr.mxu0 0.0
      %1361 = vmatpush1.msra.mxu0 0.0
      %1362 = vmatprep.subr.mxu0 0.0
      %1363 = vmatpush1.msra.mxu0 0.0
      %1364 = vmatprep.subr.mxu0 0.0
      %1365 = vmatpush1.msra.mxu0 0.0
      %1366 = vmatprep.subr.mxu0 0.0
      %1367 = vmatpush1.msra.mxu0 0.0
      %1368 = vmatprep.subr.mxu0 0.0
      %1369 = vmatpush1.msra.mxu0 0.0
      %1370 = vmatprep.subr.mxu0 0.0
      %1371 = vmatpush1.msra.mxu0 0.0
      %1372 = vmatprep.subr.mxu0 0.0
      %1373 = vmatpush1.msra.mxu0 0.0
      %1374 = vmatprep.subr.mxu0 0.0
      %1375 = vmatpush1.msra.mxu0 0.0
      %1376 = vmatprep.subr.mxu0 0.0
      %1377 = vmatpush1.msra.mxu0 0.0
      %1378 = vmatprep.mubr.f32.mxu0 0.0
      %1379 = vmatmul.mubr.f32.gmra.mrb[0].mxu0 %v1215
      %v1380 = vpop.f32.mrb[0].mxu0
      %v1381 = vadd.f32 0.0, %v1380
      %v1382 = vpop.f32.mrb[0].mxu0
      %1383 = vmatprep.mubr.f32.mxu0 0.0
      %1384 = vmatmul.mubr.f32.gmra.mrb[0].mxu0 %v1218
      %v1385 = vpop.f32.mrb[0].mxu0
      %v1386 = vadd.f32 0.0, %v1385
      %v1387 = vpop.f32.mrb[0].mxu0
      %1388 = vmatprep.mubr.f32.mxu0 0.0
      %1389 = vmatmul.mubr.f32.gmra.mrb[0].mxu0 %v1221
      %v1390 = vpop.f32.mrb[0].mxu0
      %v1391 = vadd.f32 0.0, %v1390
      %v1392 = vpop.f32.mrb[0].mxu0
      %1393 = vmatprep.mubr.f32.mxu0 0.0
      %1394 = vmatmul.mubr.f32.gmra.mrb[0].mxu0 %v1224
      %v1395 = vpop.f32.mrb[0].mxu0
      %v1396 = vadd.f32 0.0, %v1395
      %v1397 = vpop.f32.mrb[0].mxu0
      %1398 = vmatprep.mubr.f32.mxu0 0.0
      %1399 = vmatmul.mubr.f32.gmra.mrb[0].mxu0 %v1227
      %v1400 = vpop.f32.mrb[0].mxu0
      %v1401 = vadd.f32 0.0, %v1400
      %v1402 = vpop.f32.mrb[0].mxu0
      %1403 = vmatprep.mubr.f32.mxu0 0.0
      %1404 = vmatmul.mubr.f32.gmra.mrb[0].mxu0 %v1230
      %v1405 = vpop.f32.mrb[0].mxu0
      %v1406 = vadd.f32 0.0, %v1405
      %v1407 = vpop.f32.mrb[0].mxu0
      %1408 = vmatprep.mubr.f32.mxu0 0.0
      %1409 = vmatmul.mubr.f32.gmra.mrb[0].mxu0 %v1233
      %v1410 = vpop.f32.mrb[0].mxu0
      %v1411 = vadd.f32 0.0, %v1410
      %v1412 = vpop.f32.mrb[0].mxu0
      %1413 = vmatprep.mubr.f32.mxu0 0.0
      %1414 = vmatmul.mubr.f32.gmra.mrb[0].mxu0 %v1236
      %v1415 = vpop.f32.mrb[0].mxu0
      %v1416 = vadd.f32 0.0, %v1415
      %v1417 = vpop.f32.mrb[0].mxu0
      %1418 = vmatprep.mubr.f32.mxu0 0.0
      %1419 = vmatmul.mubr.f32.gmra.mrb[0].mxu0 %v1239
      %v1420 = vpop.f32.mrb[0].mxu0
      %v1421 = vadd.f32 0.0, %v1420
      %v1422 = vpop.f32.mrb[0].mxu0
      %1423 = vmatprep.mubr.f32.mxu0 0.0
      %1424 = vmatmul.mubr.f32.gmra.mrb[0].mxu0 %v1242
      %v1425 = vpop.f32.mrb[0].mxu0
      %v1426 = vadd.f32 0.0, %v1425
      %v1427 = vpop.f32.mrb[0].mxu0
      %1428 = vmatprep.mubr.f32.mxu0 0.0
      %1429 = vmatmul.mubr.f32.gmra.mrb[0].mxu0 %v1245
      %v1430 = vpop.f32.mrb[0].mxu0
      %v1431 = vadd.f32 0.0, %v1430
      %v1432 = vpop.f32.mrb[0].mxu0
      %1433 = vmatprep.mubr.f32.mxu0 0.0
      %1434 = vmatmul.mubr.f32.gmra.mrb[0].mxu0 %v1248
      %v1435 = vpop.f32.mrb[0].mxu0
      %v1436 = vadd.f32 0.0, %v1435
      %v1437 = vpop.f32.mrb[0].mxu0
      %1438 = vmatprep.mubr.f32.mxu0 0.0
      %1439 = vmatmul.mubr.f32.gmra.mrb[0].mxu0 %v1251
      %v1440 = vpop.f32.mrb[0].mxu0
      %v1441 = vadd.f32 0.0, %v1440
      %v1442 = vpop.f32.mrb[0].mxu0
      %1443 = vmatprep.mubr.f32.mxu0 0.0
      %1444 = vmatmul.mubr.f32.gmra.mrb[0].mxu0 %v1254
      %v1445 = vpop.f32.mrb[0].mxu0
      %v1446 = vadd.f32 0.0, %v1445
      %v1447 = vpop.f32.mrb[0].mxu0
      %1448 = vmatprep.mubr.f32.mxu0 0.0
      %1449 = vmatmul.mubr.f32.gmra.mrb[0].mxu0 %v1257
      %v1450 = vpop.f32.mrb[0].mxu0
      %v1451 = vadd.f32 0.0, %v1450
      %v1452 = vpop.f32.mrb[0].mxu0
      %1453 = vmatprep.mubr.f32.mxu0 0.0
      %1454 = vmatmul.mubr.f32.gmra.mrb[0].mxu0 %v1260
      %v1455 = vpop.f32.mrb[0].mxu0
      %v1456 = vadd.f32 0.0, %v1455
      %v1457 = vpop.f32.mrb[0].mxu0
      %1458 = vmatprep.mubr.f32.mxu0 0.0
      %1459 = vmatmul.mubr.f32.gmra.mrb[0].mxu0 %v1263
      %v1460 = vpop.f32.mrb[0].mxu0
      %v1461 = vadd.f32 0.0, %v1460
      %v1462 = vpop.f32.mrb[0].mxu0
      %1463 = vmatprep.mubr.f32.mxu0 0.0
      %1464 = vmatmul.mubr.f32.gmra.mrb[0].mxu0 %v1266
      %v1465 = vpop.f32.mrb[0].mxu0
      %v1466 = vadd.f32 0.0, %v1465
      %v1467 = vpop.f32.mrb[0].mxu0
      %1468 = vmatprep.mubr.f32.mxu0 0.0
      %1469 = vmatmul.mubr.f32.gmra.mrb[0].mxu0 %v1269
      %v1470 = vpop.f32.mrb[0].mxu0
      %v1471 = vadd.f32 0.0, %v1470
      %v1472 = vpop.f32.mrb[0].mxu0
      %1473 = vmatprep.mubr.f32.mxu0 0.0
      %1474 = vmatmul.mubr.f32.gmra.mrb[0].mxu0 %v1272
      %v1475 = vpop.f32.mrb[0].mxu0
      %v1476 = vadd.f32 0.0, %v1475
      %v1477 = vpop.f32.mrb[0].mxu0
      %1478 = vmatprep.mubr.f32.mxu0 0.0
      %1479 = vmatmul.mubr.f32.gmra.mrb[0].mxu0 %v1275
      %v1480 = vpop.f32.mrb[0].mxu0
      %v1481 = vadd.f32 0.0, %v1480
      %v1482 = vpop.f32.mrb[0].mxu0
      %1483 = vmatprep.mubr.f32.mxu0 0.0
      %1484 = vmatmul.mubr.f32.gmra.mrb[0].mxu0 %v1278
      %v1485 = vpop.f32.mrb[0].mxu0
      %v1486 = vadd.f32 0.0, %v1485
      %v1487 = vpop.f32.mrb[0].mxu0
      %1488 = vmatprep.mubr.f32.mxu0 0.0
      %1489 = vmatmul.mubr.f32.gmra.mrb[0].mxu0 %v1281
      %v1490 = vpop.f32.mrb[0].mxu0
      %v1491 = vadd.f32 0.0, %v1490
      %v1492 = vpop.f32.mrb[0].mxu0
      %1493 = vmatprep.mubr.f32.mxu0 0.0
      %1494 = vmatmul.mubr.f32.gmra.mrb[0].mxu0 %v1284
      %v1495 = vpop.f32.mrb[0].mxu0
      %v1496 = vadd.f32 0.0, %v1495
      %v1497 = vpop.f32.mrb[0].mxu0
      %1498 = vmatprep.mubr.f32.mxu0 0.0
      %1499 = vmatmul.mubr.f32.gmra.mrb[0].mxu0 %v1287
      %v1500 = vpop.f32.mrb[0].mxu0
      %v1501 = vadd.f32 0.0, %v1500
      %v1502 = vpop.f32.mrb[0].mxu0
      %1503 = vmatprep.mubr.f32.mxu0 0.0
      %1504 = vmatmul.mubr.f32.gmra.mrb[0].mxu0 %v1290
      %v1505 = vpop.f32.mrb[0].mxu0
      %v1506 = vadd.f32 0.0, %v1505
      %v1507 = vpop.f32.mrb[0].mxu0
      %1508 = vmatprep.mubr.f32.mxu0 0.0
      %1509 = vmatmul.mubr.f32.gmra.mrb[0].mxu0 %v1293
      %v1510 = vpop.f32.mrb[0].mxu0
      %v1511 = vadd.f32 0.0, %v1510
      %v1512 = vpop.f32.mrb[0].mxu0
      %1513 = vmatprep.mubr.f32.mxu0 0.0
      %1514 = vmatmul.mubr.f32.gmra.mrb[0].mxu0 %v1296
      %v1515 = vpop.f32.mrb[0].mxu0
      %v1516 = vadd.f32 0.0, %v1515
      %v1517 = vpop.f32.mrb[0].mxu0
      %1518 = vmatprep.mubr.f32.mxu0 0.0
      %1519 = vmatmul.mubr.f32.gmra.mrb[0].mxu0 %v1299
      %v1520 = vpop.f32.mrb[0].mxu0
      %v1521 = vadd.f32 0.0, %v1520
      %v1522 = vpop.f32.mrb[0].mxu0
      %1523 = vmatprep.mubr.f32.mxu0 0.0
      %1524 = vmatmul.mubr.f32.gmra.mrb[0].mxu0 %v1302
      %v1525 = vpop.f32.mrb[0].mxu0
      %v1526 = vadd.f32 0.0, %v1525
      %v1527 = vpop.f32.mrb[0].mxu0
      %1528 = vmatprep.mubr.f32.mxu0 0.0
      %1529 = vmatmul.mubr.f32.gmra.mrb[0].mxu0 %v1305
      %v1530 = vpop.f32.mrb[0].mxu0
      %v1531 = vadd.f32 0.0, %v1530
      %v1532 = vpop.f32.mrb[0].mxu0
      %1533 = vmatprep.mubr.f32.mxu0 0.0
      %1534 = vmatmul.mubr.f32.gmra.mrb[0].mxu0 %v1308
      %v1535 = vpop.f32.mrb[0].mxu0
      %v1536 = vadd.f32 0.0, %v1535
      %v1537 = vpop.f32.mrb[0].mxu0
      %1538 = vdwg.mxu0
      %vm1539 = vcmask 64512
      %1540 = vst.msk [vmem:[%s170] sm:$0xff] %vm1539, %v1381
      %1541 = vst.msk [vmem:[%s170 + $0x8] sm:$0xff] %vm1539, %v1386
      %1542 = vst.msk [vmem:[%s170 + $0x10] sm:$0xff] %vm1539, %v1391
      %1543 = vst.msk [vmem:[%s170 + $0x18] sm:$0xff] %vm1539, %v1396
      %1544 = vst.msk [vmem:[%s170 + $0x20] sm:$0xff] %vm1539, %v1401
      %1545 = vst.msk [vmem:[%s170 + $0x28] sm:$0xff] %vm1539, %v1406
      %1546 = vst.msk [vmem:[%s170 + $0x30] sm:$0xff] %vm1539, %v1411
      %1547 = vst.msk [vmem:[%s170 + $0x38] sm:$0xff] %vm1539, %v1416
      %1548 = vst.msk [vmem:[%s170 + $0x40] sm:$0xff] %vm1539, %v1421
      %1549 = vst.msk [vmem:[%s170 + $0x48] sm:$0xff] %vm1539, %v1426
      %1550 = vst.msk [vmem:[%s170 + $0x50] sm:$0xff] %vm1539, %v1431
      %1551 = vst.msk [vmem:[%s170 + $0x58] sm:$0xff] %vm1539, %v1436
      %1552 = vst.msk [vmem:[%s170 + $0x60] sm:$0xff] %vm1539, %v1441
      %1553 = vst.msk [vmem:[%s170 + $0x68] sm:$0xff] %vm1539, %v1446
      %1554 = vst.msk [vmem:[%s170 + $0x70] sm:$0xff] %vm1539, %v1451
      %1555 = vst.msk [vmem:[%s170 + $0x78] sm:$0xff] %vm1539, %v1456
      %1556 = vst.msk [vmem:[%s170 + $0x80] sm:$0xff] %vm1539, %v1461
      %1557 = vst.msk [vmem:[%s170 + $0x88] sm:$0xff] %vm1539, %v1466
      %1558 = vst.msk [vmem:[%s170 + $0x90] sm:$0xff] %vm1539, %v1471
      %1559 = vst.msk [vmem:[%s170 + $0x98] sm:$0xff] %vm1539, %v1476
      %1560 = vst.msk [vmem:[%s170 + $0xa0] sm:$0xff] %vm1539, %v1481
      %1561 = vst.msk [vmem:[%s170 + $0xa8] sm:$0xff] %vm1539, %v1486
      %1562 = vst.msk [vmem:[%s170 + $0xb0] sm:$0xff] %vm1539, %v1491
      %1563 = vst.msk [vmem:[%s170 + $0xb8] sm:$0xff] %vm1539, %v1496
      %1564 = vst.msk [vmem:[%s170 + $0xc0] sm:$0xff] %vm1539, %v1501
      %1565 = vst.msk [vmem:[%s170 + $0xc8] sm:$0xff] %vm1539, %v1506
      %1566 = vst.msk [vmem:[%s170 + $0xd0] sm:$0xff] %vm1539, %v1511
      %1567 = vst.msk [vmem:[%s170 + $0xd8] sm:$0xff] %vm1539, %v1516
      %1568 = vst.msk [vmem:[%s170 + $0xe0] sm:$0xff] %vm1539, %v1521
      %1569 = vst.msk [vmem:[%s170 + $0xe8] sm:$0xff] %vm1539, %v1526
      %1570 = vst.msk [vmem:[%s170 + $0xf0] sm:$0xff] %vm1539, %v1531
      %1571 = vst.msk [vmem:[%s170 + $0xf8] sm:$0xff] %vm1539, %v1536
      %p1572 = scmp.lt.s32.totalorder %s14, 1
      %s1573 = scalar_select %p1572, %s14, 1
      %s1574 = smul.addr %s1573, 32
      %s1575 = smul.addr %s1574, 8
      %s1576 = scalar_lea.vmem %s3, %s1575
      // Predicated region
      $region33: #{tpu_custom_call.1} parent=31 // pred_check
        %p1577 = pneg %p100
      $region34: #{tpu_custom_call.1} parent=31 // pred_check_branch
        %1579 = sbr.rel (%p1577) target = $region36
      $region35: #{tpu_custom_call.1} parent=31 // pred_region
        _
      $region36: #{tpu_custom_call.1} parent=31 // pred_fallthru
        _
    $region32: #{tpu_custom_call.1} parent=5 // pred_fallthru
      _
    %p1580 = scmp.le.s32.totalorder 2, %s9
    // Predicated region
    $region37: #{tpu_custom_call.1} parent=5 // pred_check
      %p1581 = pneg %p1580
    $region38: #{tpu_custom_call.1} parent=5 // pred_check_branch
      %1583 = sbr.rel (%p1581) target = $region40
    $region39: #{tpu_custom_call.1} parent=5 // pred_region
      %s1584 = ssub.s32 %s9, 2
      // Predicated region
      $region41: #{tpu_custom_call.1} parent=39 // pred_check
        %p1585 = pneg %p106
      $region42: #{tpu_custom_call.1} parent=39 // pred_check_branch
        %1587 = sbr.rel (%p1585) target = $region44
      $region43: #{tpu_custom_call.1} parent=39 // pred_region
        %p1588 = scmp.lt.s32.totalorder %s15, 1
        %s1589 = scalar_select %p1588, %s15, 1
        %s1590 = smul.addr %s1589, 32
        %s1591 = smul.addr %s1590, 8
        %s1592 = scalar_lea.vmem %s3, %s1591
      $region44: #{tpu_custom_call.1} parent=39 // pred_fallthru
        _
    $region40: #{tpu_custom_call.1} parent=5 // pred_fallthru
      _
  $region6: #{tpu_custom_call.1} parent=0 // loop_footer
    %s13 = sadd.s32 1, %s9
  $region7: #{tpu_custom_call.1} parent=0 // loop_footer_branch
    %8 = sbr.rel target = $region3
  $region8: #{tpu_custom_call.1} parent=0 // loop_exit
    _

</llo_original>
